<compile_context>
chip_gen: v7x
topology: tpu7x:2x2x1
jax: 0.10.0
libtpu: 0.0.40
codegen_flags: <defaults>
</compile_context>

<pallas_src>
import numpy as np
import jax
import jax.numpy as jnp
from jax.experimental import pallas as pl
from jax.experimental.pallas import tpu as pltpu

NUM_CLASSES = 3
IMAGE_SIZE = (62, 48)
IMG_SHAPE = (3, *IMAGE_SIZE)          # (C, H, W) = (3, 62, 48)
IMG_PROD = int(np.prod(IMG_SHAPE))    # 8928
BN_EPS = 1e-5

TN = 1280                             # output-column tile (multiple of 128)
N_PAD = pl.cdiv(IMG_PROD, TN) * TN    # 8960 = 70 * 128 -> 7 grid steps


def _generator_kernel(x_ref, w1_ref, b1_ref, w2_ref, b2_ref,
                      gamma_ref, beta_ref, w3_ref, b3_ref, out_ref):
    # Grid axis j tiles the output columns (w3 / b3 / out).  All other
    # operands use index_map -> (0, 0) so they are fetched once and stay
    # VMEM-resident across grid steps.
    x = x_ref[...]                                            # (B, latent+class)

    # Linear(latent+class -> 128) + ReLU  (tiny; recomputed per tile)
    h1 = jnp.dot(x, w1_ref[...], preferred_element_type=jnp.float32) + b1_ref[...]
    h1 = jnp.maximum(h1, 0.0)

    # Linear(128 -> 256)
    h2 = jnp.dot(h1, w2_ref[...], preferred_element_type=jnp.float32) + b2_ref[...]

    # BatchNorm1d(256): training-mode full-batch stats, biased variance.
    mean = jnp.mean(h2, axis=0, keepdims=True)
    diff = h2 - mean
    var = jnp.mean(diff * diff, axis=0, keepdims=True)
    h2 = diff * jax.lax.rsqrt(var + BN_EPS)
    h2 = h2 * gamma_ref[...] + beta_ref[...]
    h2 = jnp.maximum(h2, 0.0)

    # Linear(256 -> TN tile of padded prod(img_shape)) + Tanh.
    # bf16 x bf16 on the MXU with f32 accumulation (weights stream as bf16).
    out = jnp.dot(h2.astype(jnp.bfloat16), w3_ref[...],
                  preferred_element_type=jnp.float32) + b3_ref[...]
    out_ref[...] = jnp.tanh(out)


def generator_forward(z, labels, params, img_shape=IMG_SHAPE):
    """z: (B, latent_dim) f32, labels: (B,) int32 -> (B, *img_shape) f32.

    `params` must come from prepare_params() (W3/b3 padded to a multiple of TN,
    W3 stored as bf16)."""
    # Glue in plain JAX: embedding lookup (row gather) + concat.
    c = params["emb"][labels]                     # (B, class_dim)
    x = jnp.concatenate([z, c], axis=1).astype(jnp.float32)
    B, d_in = x.shape
    d_out = int(np.prod(img_shape))

    w3, b3 = params["w3"], params["b3"]           # (256, n_pad) bf16, (1, n_pad) f32
    n_pad = w3.shape[1]
    n_tiles = n_pad // TN

    resident = lambda j: (0, 0)                   # fetched once, stays in VMEM
    flat = pl.pallas_call(
        _generator_kernel,
        out_shape=jax.ShapeDtypeStruct((B, n_pad), jnp.float32),
        grid=(n_tiles,),
        in_specs=[
            pl.BlockSpec((B, d_in), resident),                      # x
            pl.BlockSpec(params["w1"].shape, resident),             # W1
            pl.BlockSpec(params["b1"].shape, resident),             # b1
            pl.BlockSpec(params["w2"].shape, resident),             # W2
            pl.BlockSpec(params["b2"].shape, resident),             # b2
            pl.BlockSpec(params["gamma"].shape, resident),          # gamma
            pl.BlockSpec(params["beta"].shape, resident),           # beta
            pl.BlockSpec((w3.shape[0], TN), lambda j: (0, j)),      # W3 tile
            pl.BlockSpec((1, TN), lambda j: (0, j)),                # b3 tile
        ],
        out_specs=pl.BlockSpec((B, TN), lambda j: (0, j)),
        compiler_params=pltpu.CompilerParams(
            dimension_semantics=("parallel",)),     # shards tiles across v7x TCs
        cost_estimate=pl.CostEstimate(
            flops=2 * B * (d_in * 128 + 128 * 256 + 256 * n_pad),
            transcendentals=B * n_pad,
            bytes_accessed=(w3.size * 2 + b3.size * 4 + B * n_pad * 4
                            + params["w1"].size * 4 + params["w2"].size * 4
                            + x.size * 4)),
    )(x,
      params["w1"], params["b1"],
      params["w2"], params["b2"],
      params["gamma"], params["beta"],
      w3, b3)

    return flat[:, :d_out].reshape(B, *img_shape)   # NCHW: (B, 3, 62, 48)


def init_params(key, latent_dim, class_dim, img_shape=IMG_SHAPE):
    """Deterministic synthetic parameters (shapes match the nn.Module), f32."""
    d_in = latent_dim + class_dim
    d_out = int(np.prod(img_shape))
    ks = jax.random.split(key, 7)

    def lin(kw, kb, fan_in, fan_out):
        bound = 1.0 / np.sqrt(fan_in)
        w = jax.random.uniform(kw, (fan_in, fan_out), jnp.float32, -bound, bound)
        b = jax.random.uniform(kb, (1, fan_out), jnp.float32, -bound, bound)
        return w, b

    w1, b1 = lin(ks[0], ks[1], d_in, 128)
    w2, b2 = lin(ks[2], ks[3], 128, 256)
    w3, b3 = lin(ks[4], ks[5], 256, d_out)
    emb = jax.random.normal(ks[6], (NUM_CLASSES, class_dim), jnp.float32)
    return {
        "emb": emb,
        "w1": w1, "b1": b1,
        "w2": w2, "b2": b2,
        "gamma": jnp.ones((1, 256), jnp.float32),   # BatchNorm1d weight init
        "beta": jnp.zeros((1, 256), jnp.float32),   # BatchNorm1d bias init
        "w3": w3, "b3": b3,
    }


def prepare_params(params, img_shape=IMG_SHAPE):
    """One-time kernel-layout prep: pad W3/b3 columns to a multiple of TN
    (lane-aligned, 8960 = 70*128) and store W3 as bf16 for HBM bandwidth."""
    d_out = int(np.prod(img_shape))
    n_pad = pl.cdiv(d_out, TN) * TN
    pad = n_pad - d_out
    p = dict(params)
    p["w3"] = jnp.pad(params["w3"].astype(jnp.bfloat16), ((0, 0), (0, pad)))
    p["b3"] = jnp.pad(params["b3"], ((0, 0), (0, pad)))
    return p


def _reference_forward(z, labels, params, img_shape=IMG_SHAPE):
    """Pure-JAX f32 reference (PyTorch training-mode semantics)."""
    c = params["emb"][labels]
    x = jnp.concatenate([z, c], axis=1)
    h1 = jnp.maximum(x @ params["w1"] + params["b1"], 0.0)
    h2 = h1 @ params["w2"] + params["b2"]
    mean = jnp.mean(h2, axis=0, keepdims=True)
    var = jnp.mean((h2 - mean) ** 2, axis=0, keepdims=True)
    h2 = (h2 - mean) / jnp.sqrt(var + BN_EPS)
    h2 = jnp.maximum(h2 * params["gamma"] + params["beta"], 0.0)
    out = jnp.tanh(h2 @ params["w3"] + params["b3"])
    return out.reshape(z.shape[0], *img_shape)


if __name__ == "__main__":
    latent_dim, class_dim, batch = 16, 8, 8

    key = jax.random.PRNGKey(0)
    k_params, k_z, k_lbl = jax.random.split(key, 3)

    params_f32 = init_params(k_params, latent_dim, class_dim, IMG_SHAPE)
    params = prepare_params(params_f32, IMG_SHAPE)

    z = jax.random.normal(k_z, (batch, latent_dim), jnp.float32)
    labels = jax.random.randint(k_lbl, (batch,), 0, NUM_CLASSES, jnp.int32)

    img = generator_forward(z, labels, params, IMG_SHAPE)
    jax.block_until_ready(img)

    assert img.shape == (batch, *IMG_SHAPE), img.shape
    assert img.dtype == jnp.float32
    # tanh output range sanity check
    assert float(jnp.max(jnp.abs(img))) <= 1.0 + 1e-6

    # correctness vs pure-JAX f32 reference (loose tol: W3 streamed as bf16)
    ref = _reference_forward(z, labels, params_f32, IMG_SHAPE)
    max_err = float(jnp.max(jnp.abs(img - ref)))
    assert max_err < 5e-2, max_err

    print("KERNEL_OK")
</pallas_src>

<mosaic_0001>
module attributes {stable_mosaic.version = 11 : i64} {
  func.func @_generator_kernel(%arg0: i32, %arg1: memref<8x24xf32, #tpu.memory_space<vmem>>, %arg2: memref<24x128xf32, #tpu.memory_space<vmem>>, %arg3: memref<1x128xf32, #tpu.memory_space<vmem>>, %arg4: memref<128x256xf32, #tpu.memory_space<vmem>>, %arg5: memref<1x256xf32, #tpu.memory_space<vmem>>, %arg6: memref<1x256xf32, #tpu.memory_space<vmem>>, %arg7: memref<1x256xf32, #tpu.memory_space<vmem>>, %arg8: memref<256x1280xbf16, #tpu.memory_space<vmem>>, %arg9: memref<1x1280xf32, #tpu.memory_space<vmem>>, %arg10: memref<8x1280xf32, #tpu.memory_space<vmem>>) attributes {dimension_semantics = [#tpu.dimension_semantics<parallel>], iteration_bounds = array<i64: 7>, scalar_prefetch = 0 : i64, scratch_operands = 0 : i64, tpu.core_type = #tpu.core_type<tc>, window_params = [{pipeline_mode = #tpu.pipeline_mode<synchronous>, transform_indices = @transform_0, window_bounds = array<i64: 8, 24>}, {pipeline_mode = #tpu.pipeline_mode<synchronous>, transform_indices = @transform_1, window_bounds = array<i64: 24, 128>}, {pipeline_mode = #tpu.pipeline_mode<synchronous>, transform_indices = @transform_2, window_bounds = array<i64: 1, 128>}, {pipeline_mode = #tpu.pipeline_mode<synchronous>, transform_indices = @transform_3, window_bounds = array<i64: 128, 256>}, {pipeline_mode = #tpu.pipeline_mode<synchronous>, transform_indices = @transform_4, window_bounds = array<i64: 1, 256>}, {pipeline_mode = #tpu.pipeline_mode<synchronous>, transform_indices = @transform_5, window_bounds = array<i64: 1, 256>}, {pipeline_mode = #tpu.pipeline_mode<synchronous>, transform_indices = @transform_6, window_bounds = array<i64: 1, 256>}, {transform_indices = @transform_7, window_bounds = array<i64: 256, 1280>}, {transform_indices = @transform_8, window_bounds = array<i64: 1, 1280>}, {transform_indices = @transform_9, window_bounds = array<i64: 8, 1280>}]} {
    %c0 = arith.constant 0 : index
    %c0_0 = arith.constant 0 : index
    %0 = vector.load %arg1[%c0, %c0_0] : memref<8x24xf32, #tpu.memory_space<vmem>>, vector<8x24xf32>
    %c0_1 = arith.constant 0 : index
    %c0_2 = arith.constant 0 : index
    %1 = vector.load %arg2[%c0_1, %c0_2] : memref<24x128xf32, #tpu.memory_space<vmem>>, vector<24x128xf32>
    %cst = arith.constant dense<0.000000e+00> : vector<8x128xf32>
    %2 = tpu.matmul %0, %1, %cst {dimension_numbers = #tpu.dot_dimension_numbers<[1], [0], [0], [1], [0, 0, 1, 1], [], []>} : vector<8x24xf32>, vector<24x128xf32>, vector<8x128xf32> -> vector<8x128xf32>
    %c0_3 = arith.constant 0 : index
    %c0_4 = arith.constant 0 : index
    %3 = vector.load %arg3[%c0_3, %c0_4] : memref<1x128xf32, #tpu.memory_space<vmem>>, vector<1x128xf32>
    %4 = vector.broadcast %3 : vector<1x128xf32> to vector<8x128xf32>
    %5 = arith.addf %2, %4 : vector<8x128xf32>
    %cst_5 = arith.constant 0.000000e+00 : f32
    %6 = vector.broadcast %cst_5 : f32 to vector<8x128xf32>
    %7 = arith.maximumf %5, %6 : vector<8x128xf32>
    %c0_6 = arith.constant 0 : index
    %c0_7 = arith.constant 0 : index
    %8 = vector.load %arg4[%c0_6, %c0_7] : memref<128x256xf32, #tpu.memory_space<vmem>>, vector<128x256xf32>
    %cst_8 = arith.constant dense<0.000000e+00> : vector<8x256xf32>
    %9 = tpu.matmul %7, %8, %cst_8 {dimension_numbers = #tpu.dot_dimension_numbers<[1], [0], [0], [1], [0, 0, 1, 1], [], []>} : vector<8x128xf32>, vector<128x256xf32>, vector<8x256xf32> -> vector<8x256xf32>
    %c0_9 = arith.constant 0 : index
    %c0_10 = arith.constant 0 : index
    %10 = vector.load %arg5[%c0_9, %c0_10] : memref<1x256xf32, #tpu.memory_space<vmem>>, vector<1x256xf32>
    %11 = vector.broadcast %10 : vector<1x256xf32> to vector<8x256xf32>
    %12 = arith.addf %9, %11 : vector<8x256xf32>
    %cst_11 = arith.constant dense<0.000000e+00> : vector<256xf32>
    %13 = vector.multi_reduction <add>, %12, %cst_11 [0] : vector<8x256xf32> to vector<256xf32>
    %14 = vector.shape_cast %13 : vector<256xf32> to vector<1x256xf32>
    %cst_12 = arith.constant 8.000000e+00 : f32
    %15 = vector.broadcast %cst_12 : f32 to vector<1x256xf32>
    %16 = arith.divf %14, %15 : vector<1x256xf32>
    %17 = vector.broadcast %16 : vector<1x256xf32> to vector<8x256xf32>
    %18 = arith.subf %12, %17 : vector<8x256xf32>
    %19 = arith.mulf %18, %18 : vector<8x256xf32>
    %cst_13 = arith.constant dense<0.000000e+00> : vector<256xf32>
    %20 = vector.multi_reduction <add>, %19, %cst_13 [0] : vector<8x256xf32> to vector<256xf32>
    %21 = vector.shape_cast %20 : vector<256xf32> to vector<1x256xf32>
    %cst_14 = arith.constant 8.000000e+00 : f32
    %22 = vector.broadcast %cst_14 : f32 to vector<1x256xf32>
    %23 = arith.divf %21, %22 : vector<1x256xf32>
    %cst_15 = arith.constant 9.99999974E-6 : f32
    %24 = vector.broadcast %cst_15 : f32 to vector<1x256xf32>
    %25 = arith.addf %23, %24 : vector<1x256xf32>
    %26 = math.rsqrt %25 : vector<1x256xf32>
    %27 = vector.broadcast %26 : vector<1x256xf32> to vector<8x256xf32>
    %28 = arith.mulf %18, %27 : vector<8x256xf32>
    %c0_16 = arith.constant 0 : index
    %c0_17 = arith.constant 0 : index
    %29 = vector.load %arg6[%c0_16, %c0_17] : memref<1x256xf32, #tpu.memory_space<vmem>>, vector<1x256xf32>
    %30 = vector.broadcast %29 : vector<1x256xf32> to vector<8x256xf32>
    %31 = arith.mulf %28, %30 : vector<8x256xf32>
    %c0_18 = arith.constant 0 : index
    %c0_19 = arith.constant 0 : index
    %32 = vector.load %arg7[%c0_18, %c0_19] : memref<1x256xf32, #tpu.memory_space<vmem>>, vector<1x256xf32>
    %33 = vector.broadcast %32 : vector<1x256xf32> to vector<8x256xf32>
    %34 = arith.addf %31, %33 : vector<8x256xf32>
    %cst_20 = arith.constant 0.000000e+00 : f32
    %35 = vector.broadcast %cst_20 : f32 to vector<8x256xf32>
    %36 = arith.maximumf %34, %35 : vector<8x256xf32>
    %37 = arith.truncf %36 : vector<8x256xf32> to vector<8x256xbf16>
    %c0_21 = arith.constant 0 : index
    %c0_22 = arith.constant 0 : index
    %38 = vector.load %arg8[%c0_21, %c0_22] : memref<256x1280xbf16, #tpu.memory_space<vmem>>, vector<256x1280xbf16>
    %cst_23 = arith.constant dense<0.000000e+00> : vector<8x1280xf32>
    %39 = tpu.matmul %37, %38, %cst_23 {dimension_numbers = #tpu.dot_dimension_numbers<[1], [0], [0], [1], [0, 0, 1, 1], [], []>} : vector<8x256xbf16>, vector<256x1280xbf16>, vector<8x1280xf32> -> vector<8x1280xf32>
    %c0_24 = arith.constant 0 : index
    %c0_25 = arith.constant 0 : index
    %40 = vector.load %arg9[%c0_24, %c0_25] : memref<1x1280xf32, #tpu.memory_space<vmem>>, vector<1x1280xf32>
    %41 = vector.broadcast %40 : vector<1x1280xf32> to vector<8x1280xf32>
    %42 = arith.addf %39, %41 : vector<8x1280xf32>
    %43 = math.tanh %42 : vector<8x1280xf32>
    %c0_26 = arith.constant 0 : index
    %c0_27 = arith.constant 0 : index
    %44 = vector.load %arg10[%c0_26, %c0_27] : memref<8x1280xf32, #tpu.memory_space<vmem>>, vector<8x1280xf32>
    tpu.vector_store %arg10[%c0_26, %c0_27], %43 {strides = array<i32>} : memref<8x1280xf32, #tpu.memory_space<vmem>>, vector<8x1280xf32>,
    return
  }
  func.func @transform_0(%arg0: i32) -> (i32, i32) {
    %c0_i32 = arith.constant 0 : i32
    %c0_i32_0 = arith.constant 0 : i32
    %c0_i32_1 = arith.constant 0 : i32
    return %c0_i32, %c0_i32_0 : i32, i32
  }
  func.func @transform_1(%arg0: i32) -> (i32, i32) {
    %c0_i32 = arith.constant 0 : i32
    %c0_i32_0 = arith.constant 0 : i32
    %c0_i32_1 = arith.constant 0 : i32
    return %c0_i32, %c0_i32_0 : i32, i32
  }
  func.func @transform_2(%arg0: i32) -> (i32, i32) {
    %c0_i32 = arith.constant 0 : i32
    %c0_i32_0 = arith.constant 0 : i32
    %c0_i32_1 = arith.constant 0 : i32
    return %c0_i32, %c0_i32_0 : i32, i32
  }
  func.func @transform_3(%arg0: i32) -> (i32, i32) {
    %c0_i32 = arith.constant 0 : i32
    %c0_i32_0 = arith.constant 0 : i32
    %c0_i32_1 = arith.constant 0 : i32
    return %c0_i32, %c0_i32_0 : i32, i32
  }
  func.func @transform_4(%arg0: i32) -> (i32, i32) {
    %c0_i32 = arith.constant 0 : i32
    %c0_i32_0 = arith.constant 0 : i32
    %c0_i32_1 = arith.constant 0 : i32
    return %c0_i32, %c0_i32_0 : i32, i32
  }
  func.func @transform_5(%arg0: i32) -> (i32, i32) {
    %c0_i32 = arith.constant 0 : i32
    %c0_i32_0 = arith.constant 0 : i32
    %c0_i32_1 = arith.constant 0 : i32
    return %c0_i32, %c0_i32_0 : i32, i32
  }
  func.func @transform_6(%arg0: i32) -> (i32, i32) {
    %c0_i32 = arith.constant 0 : i32
    %c0_i32_0 = arith.constant 0 : i32
    %c0_i32_1 = arith.constant 0 : i32
    return %c0_i32, %c0_i32_0 : i32, i32
  }
  func.func @transform_7(%arg0: i32) -> (i32, i32) {
    %c0_i32 = arith.constant 0 : i32
    %c0_i32_0 = arith.constant 0 : i32
    return %c0_i32, %arg0 : i32, i32
  }
  func.func @transform_8(%arg0: i32) -> (i32, i32) {
    %c0_i32 = arith.constant 0 : i32
    %c0_i32_0 = arith.constant 0 : i32
    return %c0_i32, %arg0 : i32, i32
  }
  func.func @transform_9(%arg0: i32) -> (i32, i32) {
    %c0_i32 = arith.constant 0 : i32
    %c0_i32_0 = arith.constant 0 : i32
    return %c0_i32, %arg0 : i32, i32
  }
}

</mosaic_0001>

<llo_original>
// kernel: tpu_custom_call.1
$region0: #{tpu_custom_call.1}
  #allocation0 [shape = 'u32[]', space=smem, size = 0x4, offset = 0x4, fixed_abs, tag = 'smem constant byte address 0x4 - core index']
  #allocation1 [shape = 'u32[144,128]{1,0:T(1,128)}', space=vmem, size = 0x12000, scoped, tag = 'internal scratch']
  %s0 = inlined_call_operand.hbm [shape: f32[8,24], index: 0, kind: input, shape index: {}]
  %s1 = inlined_call_operand.hbm [shape: f32[24,128], index: 1, kind: input, shape index: {}]
  %s2 = inlined_call_operand.hbm [shape: f32[1,128], index: 2, kind: input, shape index: {}]
  %s3 = inlined_call_operand.hbm [shape: f32[128,256], index: 3, kind: input, shape index: {}]
  %s4 = inlined_call_operand.hbm [shape: f32[1,256], index: 4, kind: input, shape index: {}]
  %s5 = inlined_call_operand.hbm [shape: f32[1,256], index: 5, kind: input, shape index: {}]
  %s6 = inlined_call_operand.hbm [shape: f32[1,256], index: 6, kind: input, shape index: {}]
  %s7 = inlined_call_operand.hbm [shape: bf16[256,8960], index: 7, kind: input, shape index: {}]
  %s8 = inlined_call_operand.hbm [shape: f32[1,8960], index: 8, kind: input, shape index: {}]
  %s9 = inlined_call_operand.hbm [shape: f32[8,8960], index: 9, kind: output, shape index: {}]
  %s10 = sld [smem:[#allocation0]]
  $region105: #{tpu_custom_call.1} parent=0
    _
  %s12 = ssub.s32 1, %s10
  %s13 = scalar_select 0, %s12, %s10
  $region1: #{tpu_custom_call.1} parent=0
    #allocation2 [shape = 'u8[4096]{0}', space=vmem, size = 0x1000, scoped, tag = 'input window, operand 0, single buffered']
    #allocation3 [shape = 's32[2]{0}', space=sflag, size = 0x8, scoped, tag = 'scoped memory for tpu_custom_call.1']
    #allocation4 [shape = 's32[2]{0}', space=sflag, size = 0x8, scoped, tag = 'scoped memory for tpu_custom_call.1']
    #allocation5 [shape = 'u8[12288]{0}', space=vmem, size = 0x3000, scoped, tag = 'input window, operand 1, single buffered']
    #allocation6 [shape = 's32[1]{0}', space=sflag, size = 0x4, scoped, tag = 'scoped memory for tpu_custom_call.1']
    #allocation7 [shape = 'u8[512]{0}', space=vmem, size = 0x400, scoped, tag = 'input window, operand 2, single buffered']
    #allocation8 [shape = 'u8[131072]{0}', space=vmem, size = 0x20000, scoped, tag = 'input window, operand 3, single buffered']
    #allocation9 [shape = 's32[1]{0}', space=sflag, size = 0x4, scoped, tag = 'scoped memory for tpu_custom_call.1']
    #allocation10 [shape = 'u8[1024]{0}', space=vmem, size = 0x400, scoped, tag = 'input window, operand 4, single buffered']
    #allocation11 [shape = 'u8[1024]{0}', space=vmem, size = 0x400, scoped, tag = 'input window, operand 5, single buffered']
    #allocation12 [shape = 's32[1]{0}', space=sflag, size = 0x4, scoped, tag = 'scoped memory for tpu_custom_call.1']
    #allocation13 [shape = 'u8[1024]{0}', space=vmem, size = 0x400, scoped, tag = 'input window, operand 6, single buffered']
    #allocation14 [shape = 'u8[1310720]{0}', space=vmem, size = 0x140000, scoped, tag = 'input window, operand 7']
    #allocation15 [shape = 's32[2]{0}', space=sflag, size = 0x8, scoped, tag = 'scoped memory for tpu_custom_call.1']
    #allocation16 [shape = 'u8[10240]{0}', space=vmem, size = 0x2800, scoped, tag = 'input window, operand 8']
    #allocation17 [shape = 'u8[81920]{0}', space=vmem, size = 0x14000, scoped, tag = 'output window, operand 0']
    %14 = vsyncpa [#allocation3], 0
    %15 = vsyncpa [#allocation6], 0
    %16 = vsyncpa [#allocation9], 0
    %17 = vsyncpa [#allocation12], 0
    %18 = vsyncpa [#allocation15], 0
    %s19 = scalar_lea.sflag [#allocation15], 1
    %20 = vsyncpa %s19, 0
    %21 = vsyncpa [#allocation4], 0
    %s22 = scalar_lea.sflag [#allocation4], 1
    %23 = vsyncpa %s22, 0
    loop: start=0, step=1, limit=9
    $region2: #{tpu_custom_call.1} parent=1 // loop_pre_header
      _
    $region3: #{tpu_custom_call.1} parent=1 // loop_header
      %s25 = sphi 0, %s29
      %p26 = scmp.ge.s32.totalorder %s25, 9
      %s33 = sphi 0, %s33
      %s35 = sphi 0, %s33
      %s36 = sphi 0, %s35
      %s50 = sphi 0, %s36
      %s54 = sphi 0, %s54
      %s56 = sphi 0, %s54
      %s57 = sphi 0, %s56
      %s71 = sphi 0, %s57
      %s75 = sphi 0, %s75
      %s77 = sphi 0, %s75
      %s78 = sphi 0, %s77
      %s92 = sphi 0, %s78
      %s96 = sphi 0, %s96
      %s98 = sphi 0, %s96
      %s99 = sphi 0, %s98
      %s113 = sphi 0, %s99
      %s117 = sphi 0, %s117
      %s119 = sphi 0, %s117
      %s120 = sphi 0, %s119
      %s134 = sphi 0, %s120
      %s138 = sphi 0, %s138
      %s140 = sphi 0, %s138
      %s141 = sphi 0, %s140
      %s155 = sphi 0, %s141
      %s159 = sphi 0, %s159
      %s161 = sphi 0, %s159
      %s162 = sphi 0, %s161
      %s176 = sphi 0, %s162
      %s182 = sphi 0, %s184
      %s185 = sphi 0, %s182
      %s186 = sphi 0, %s185
      %s202 = sphi 0, %s186
      %s208 = sphi 0, %s210
      %s211 = sphi 0, %s208
      %s212 = sphi 0, %s211
      %s228 = sphi 0, %s212
      %s234 = sphi 0, %s236
      %s237 = sphi 0, %s234
      %s238 = sphi 0, %s237
      %s254 = sphi 0, %s238
    $region4: #{tpu_custom_call.1} parent=1 // loop_header_branch
      %28 = sbr.rel (%p26) target = $region8
    $region5: #{tpu_custom_call.1} parent=1 // loop_body
      %s30 = ssub.s32 %s25, 1
      %s31 = ssub.s32 %s25, 2
      %s32 = sadd.s32 %s25, 1
      %s34 = sadd.s32 %s33, 1
      %p37 = scmp.eq.s32.totalorder %s25, 6
      %p38 = scmp.ne.s32.totalorder %s33, %s35
      %p39 = scmp.eq.s32.totalorder %s25, 0
      %p40 = por %p38, %p39
      %p41 = scmp.ne.s32.totalorder %s33, %s35
      %p42 = scmp.eq.s32.totalorder %s30, 6
      %p43 = por %p41, %p42
      %p44 = scmp.ne.s32.totalorder %s35, %s36
      %p45 = scmp.eq.s32.totalorder %s30, 0
      %p46 = por %p44, %p45
      %p47 = scmp.ne.s32.totalorder %s35, %s36
      %p48 = scmp.eq.s32.totalorder %s31, 6
      %p49 = por %p47, %p48
      %p51 = scmp.ne.s32.totalorder %s36, %s50
      %p52 = scmp.eq.s32.totalorder %s31, 0
      %p53 = por %p51, %p52
      %s55 = sadd.s32 %s54, 1
      %p58 = scmp.eq.s32.totalorder %s25, 6
      %p59 = scmp.ne.s32.totalorder %s54, %s56
      %p60 = scmp.eq.s32.totalorder %s25, 0
      %p61 = por %p59, %p60
      %p62 = scmp.ne.s32.totalorder %s54, %s56
      %p63 = scmp.eq.s32.totalorder %s30, 6
      %p64 = por %p62, %p63
      %p65 = scmp.ne.s32.totalorder %s56, %s57
      %p66 = scmp.eq.s32.totalorder %s30, 0
      %p67 = por %p65, %p66
      %p68 = scmp.ne.s32.totalorder %s56, %s57
      %p69 = scmp.eq.s32.totalorder %s31, 6
      %p70 = por %p68, %p69
      %p72 = scmp.ne.s32.totalorder %s57, %s71
      %p73 = scmp.eq.s32.totalorder %s31, 0
      %p74 = por %p72, %p73
      %s76 = sadd.s32 %s75, 1
      %p79 = scmp.eq.s32.totalorder %s25, 6
      %p80 = scmp.ne.s32.totalorder %s75, %s77
      %p81 = scmp.eq.s32.totalorder %s25, 0
      %p82 = por %p80, %p81
      %p83 = scmp.ne.s32.totalorder %s75, %s77
      %p84 = scmp.eq.s32.totalorder %s30, 6
      %p85 = por %p83, %p84
      %p86 = scmp.ne.s32.totalorder %s77, %s78
      %p87 = scmp.eq.s32.totalorder %s30, 0
      %p88 = por %p86, %p87
      %p89 = scmp.ne.s32.totalorder %s77, %s78
      %p90 = scmp.eq.s32.totalorder %s31, 6
      %p91 = por %p89, %p90
      %p93 = scmp.ne.s32.totalorder %s78, %s92
      %p94 = scmp.eq.s32.totalorder %s31, 0
      %p95 = por %p93, %p94
      %s97 = sadd.s32 %s96, 1
      %p100 = scmp.eq.s32.totalorder %s25, 6
      %p101 = scmp.ne.s32.totalorder %s96, %s98
      %p102 = scmp.eq.s32.totalorder %s25, 0
      %p103 = por %p101, %p102
      %p104 = scmp.ne.s32.totalorder %s96, %s98
      %p105 = scmp.eq.s32.totalorder %s30, 6
      %p106 = por %p104, %p105
      %p107 = scmp.ne.s32.totalorder %s98, %s99
      %p108 = scmp.eq.s32.totalorder %s30, 0
      %p109 = por %p107, %p108
      %p110 = scmp.ne.s32.totalorder %s98, %s99
      %p111 = scmp.eq.s32.totalorder %s31, 6
      %p112 = por %p110, %p111
      %p114 = scmp.ne.s32.totalorder %s99, %s113
      %p115 = scmp.eq.s32.totalorder %s31, 0
      %p116 = por %p114, %p115
      %s118 = sadd.s32 %s117, 1
      %p121 = scmp.eq.s32.totalorder %s25, 6
      %p122 = scmp.ne.s32.totalorder %s117, %s119
      %p123 = scmp.eq.s32.totalorder %s25, 0
      %p124 = por %p122, %p123
      %p125 = scmp.ne.s32.totalorder %s117, %s119
      %p126 = scmp.eq.s32.totalorder %s30, 6
      %p127 = por %p125, %p126
      %p128 = scmp.ne.s32.totalorder %s119, %s120
      %p129 = scmp.eq.s32.totalorder %s30, 0
      %p130 = por %p128, %p129
      %p131 = scmp.ne.s32.totalorder %s119, %s120
      %p132 = scmp.eq.s32.totalorder %s31, 6
      %p133 = por %p131, %p132
      %p135 = scmp.ne.s32.totalorder %s120, %s134
      %p136 = scmp.eq.s32.totalorder %s31, 0
      %p137 = por %p135, %p136
      %s139 = sadd.s32 %s138, 1
      %p142 = scmp.eq.s32.totalorder %s25, 6
      %p143 = scmp.ne.s32.totalorder %s138, %s140
      %p144 = scmp.eq.s32.totalorder %s25, 0
      %p145 = por %p143, %p144
      %p146 = scmp.ne.s32.totalorder %s138, %s140
      %p147 = scmp.eq.s32.totalorder %s30, 6
      %p148 = por %p146, %p147
      %p149 = scmp.ne.s32.totalorder %s140, %s141
      %p150 = scmp.eq.s32.totalorder %s30, 0
      %p151 = por %p149, %p150
      %p152 = scmp.ne.s32.totalorder %s140, %s141
      %p153 = scmp.eq.s32.totalorder %s31, 6
      %p154 = por %p152, %p153
      %p156 = scmp.ne.s32.totalorder %s141, %s155
      %p157 = scmp.eq.s32.totalorder %s31, 0
      %p158 = por %p156, %p157
      %s160 = sadd.s32 %s159, 1
      %p163 = scmp.eq.s32.totalorder %s25, 6
      %p164 = scmp.ne.s32.totalorder %s159, %s161
      %p165 = scmp.eq.s32.totalorder %s25, 0
      %p166 = por %p164, %p165
      %p167 = scmp.ne.s32.totalorder %s159, %s161
      %p168 = scmp.eq.s32.totalorder %s30, 6
      %p169 = por %p167, %p168
      %p170 = scmp.ne.s32.totalorder %s161, %s162
      %p171 = scmp.eq.s32.totalorder %s30, 0
      %p172 = por %p170, %p171
      %p173 = scmp.ne.s32.totalorder %s161, %s162
      %p174 = scmp.eq.s32.totalorder %s31, 6
      %p175 = por %p173, %p174
      %p177 = scmp.ne.s32.totalorder %s162, %s176
      %p178 = scmp.eq.s32.totalorder %s31, 0
      %p179 = por %p177, %p178
      %s180 = ssub.s32 %s25, %s32
      %p181 = scmp.eq.s32.totalorder %s180, 0
      %s183 = sadd.s32 %s182, 1
      %s184 = scalar_select %p181, %s182, %s183
      %p187 = pneg %p181
      %p188 = scmp.eq.s32.totalorder %s25, 6
      %p189 = por %p187, %p188
      %p190 = scmp.ne.s32.totalorder %s182, %s185
      %p191 = scmp.eq.s32.totalorder %s25, 0
      %p192 = por %p190, %p191
      %p193 = scmp.ne.s32.totalorder %s182, %s185
      %p194 = scmp.eq.s32.totalorder %s30, 6
      %p195 = por %p193, %p194
      %p196 = scmp.ne.s32.totalorder %s185, %s186
      %p197 = scmp.eq.s32.totalorder %s30, 0
      %p198 = por %p196, %p197
      %p199 = scmp.ne.s32.totalorder %s185, %s186
      %p200 = scmp.eq.s32.totalorder %s31, 6
      %p201 = por %p199, %p200
      %p203 = scmp.ne.s32.totalorder %s186, %s202
      %p204 = scmp.eq.s32.totalorder %s31, 0
      %p205 = por %p203, %p204
      %s206 = ssub.s32 %s25, %s32
      %p207 = scmp.eq.s32.totalorder %s206, 0
      %s209 = sadd.s32 %s208, 1
      %s210 = scalar_select %p207, %s208, %s209
      %p213 = pneg %p207
      %p214 = scmp.eq.s32.totalorder %s25, 6
      %p215 = por %p213, %p214
      %p216 = scmp.ne.s32.totalorder %s208, %s211
      %p217 = scmp.eq.s32.totalorder %s25, 0
      %p218 = por %p216, %p217
      %p219 = scmp.ne.s32.totalorder %s208, %s211
      %p220 = scmp.eq.s32.totalorder %s30, 6
      %p221 = por %p219, %p220
      %p222 = scmp.ne.s32.totalorder %s211, %s212
      %p223 = scmp.eq.s32.totalorder %s30, 0
      %p224 = por %p222, %p223
      %p225 = scmp.ne.s32.totalorder %s211, %s212
      %p226 = scmp.eq.s32.totalorder %s31, 6
      %p227 = por %p225, %p226
      %p229 = scmp.ne.s32.totalorder %s212, %s228
      %p230 = scmp.eq.s32.totalorder %s31, 0
      %p231 = por %p229, %p230
      %s232 = ssub.s32 %s25, %s32
      %p233 = scmp.eq.s32.totalorder %s232, 0
      %s235 = sadd.s32 %s234, 1
      %s236 = scalar_select %p233, %s234, %s235
      %p239 = pneg %p233
      %p240 = scmp.eq.s32.totalorder %s25, 6
      %p241 = por %p239, %p240
      %p242 = scmp.ne.s32.totalorder %s234, %s237
      %p243 = scmp.eq.s32.totalorder %s25, 0
      %p244 = por %p242, %p243
      %p245 = scmp.ne.s32.totalorder %s234, %s237
      %p246 = scmp.eq.s32.totalorder %s30, 6
      %p247 = por %p245, %p246
      %p248 = scmp.ne.s32.totalorder %s237, %s238
      %p249 = scmp.eq.s32.totalorder %s30, 0
      %p250 = por %p248, %p249
      %p251 = scmp.ne.s32.totalorder %s237, %s238
      %p252 = scmp.eq.s32.totalorder %s31, 6
      %p253 = por %p251, %p252
      %p255 = scmp.ne.s32.totalorder %s238, %s254
      %p256 = scmp.eq.s32.totalorder %s31, 0
      %p257 = por %p255, %p256
      %p258 = scmp.le.s32.totalorder 1, %s25
      %p259 = scmp.lt.s32.totalorder %s25, 8
      %p260 = pnand %p258, %p259
      %p261 = pneg %p260
      // Predicated region
      $region9: #{tpu_custom_call.1} parent=5 // pred_check
        _
      $region10: #{tpu_custom_call.1} parent=5 // pred_check_branch
        %263 = sbr.rel (%p260) target = $region12
      $region11: #{tpu_custom_call.1} parent=5 // pred_region
        %s264 = ssub.s32 %s25, 1
        // Predicated region
        $region13: #{tpu_custom_call.1} parent=11 // pred_check
          %p265 = pneg %p46
        $region14: #{tpu_custom_call.1} parent=11 // pred_check_branch
          %267 = sbr.rel (%p265) target = $region16
        $region15: #{tpu_custom_call.1} parent=11 // pred_region
          %s269 = ssub.s32 128, 128
          %270 = vsyncadd [#allocation3], %s269
          %s272 = sshll.u32 [#allocation2], 4
          %s273 = int_to_ptr.vmem [resolvable:$true] %s272
          %275 = dma.hbm_to_vmem [thread:$0]  %s0, 128, %s273, [#allocation3]
        $region16: #{tpu_custom_call.1} parent=11 // pred_fallthru
          _
        // Predicated region
        $region17: #{tpu_custom_call.1} parent=11 // pred_check
          %p276 = pneg %p67
        $region18: #{tpu_custom_call.1} parent=11 // pred_check_branch
          %278 = sbr.rel (%p276) target = $region20
        $region19: #{tpu_custom_call.1} parent=11 // pred_region
          %s280 = ssub.s32 384, 384
          %281 = vsyncadd [#allocation6], %s280
          %s282 = sshll.u32 [#allocation5], 4
          %s283 = int_to_ptr.vmem [resolvable:$true] %s282
          %288 = dma.hbm_to_vmem [thread:$0]  %s1, 384, %s283, [#allocation6], 128, 128, 8
        $region20: #{tpu_custom_call.1} parent=11 // pred_fallthru
          _
        // Predicated region
        $region21: #{tpu_custom_call.1} parent=11 // pred_check
          %p289 = pneg %p88
        $region22: #{tpu_custom_call.1} parent=11 // pred_check_branch
          %291 = sbr.rel (%p289) target = $region24
        $region23: #{tpu_custom_call.1} parent=11 // pred_region
          %s293 = ssub.s32 16, 16
          %294 = vsyncadd [#allocation6], %s293
          %s296 = sshll.u32 [#allocation7], 4
          %s297 = int_to_ptr.vmem [resolvable:$true] %s296
          %299 = dma.hbm_to_vmem [thread:$0]  %s2, 16, %s297, [#allocation6]
        $region24: #{tpu_custom_call.1} parent=11 // pred_fallthru
          _
        // Predicated region
        $region25: #{tpu_custom_call.1} parent=11 // pred_check
          %p300 = pneg %p109
        $region26: #{tpu_custom_call.1} parent=11 // pred_check_branch
          %302 = sbr.rel (%p300) target = $region28
        $region27: #{tpu_custom_call.1} parent=11 // pred_region
          %s304 = ssub.s32 4096, 4096
          %305 = vsyncadd [#allocation9], %s304
          %s306 = sshll.u32 [#allocation8], 4
          %s307 = int_to_ptr.vmem [resolvable:$true] %s306
          %312 = dma.hbm_to_vmem [thread:$0]  %s3, 4096, %s307, [#allocation9], 256, 256, 16
        $region28: #{tpu_custom_call.1} parent=11 // pred_fallthru
          _
        // Predicated region
        $region29: #{tpu_custom_call.1} parent=11 // pred_check
          %p313 = pneg %p130
        $region30: #{tpu_custom_call.1} parent=11 // pred_check_branch
          %315 = sbr.rel (%p313) target = $region32
        $region31: #{tpu_custom_call.1} parent=11 // pred_region
          %s317 = ssub.s32 32, 32
          %318 = vsyncadd [#allocation9], %s317
          %s320 = sshll.u32 [#allocation10], 4
          %s321 = int_to_ptr.vmem [resolvable:$true] %s320
          %323 = dma.hbm_to_vmem [thread:$0]  %s4, 32, %s321, [#allocation9]
        $region32: #{tpu_custom_call.1} parent=11 // pred_fallthru
          _
        // Predicated region
        $region33: #{tpu_custom_call.1} parent=11 // pred_check
          %p324 = pneg %p151
        $region34: #{tpu_custom_call.1} parent=11 // pred_check_branch
          %326 = sbr.rel (%p324) target = $region36
        $region35: #{tpu_custom_call.1} parent=11 // pred_region
          %s328 = ssub.s32 32, 32
          %329 = vsyncadd [#allocation12], %s328
          %s331 = sshll.u32 [#allocation11], 4
          %s332 = int_to_ptr.vmem [resolvable:$true] %s331
          %334 = dma.hbm_to_vmem [thread:$0]  %s5, 32, %s332, [#allocation12]
        $region36: #{tpu_custom_call.1} parent=11 // pred_fallthru
          _
        // Predicated region
        $region37: #{tpu_custom_call.1} parent=11 // pred_check
          %p335 = pneg %p172
        $region38: #{tpu_custom_call.1} parent=11 // pred_check_branch
          %337 = sbr.rel (%p335) target = $region40
        $region39: #{tpu_custom_call.1} parent=11 // pred_region
          %s339 = ssub.s32 32, 32
          %340 = vsyncadd [#allocation12], %s339
          %s342 = sshll.u32 [#allocation13], 4
          %s343 = int_to_ptr.vmem [resolvable:$true] %s342
          %345 = dma.hbm_to_vmem [thread:$0]  %s6, 32, %s343, [#allocation12]
        $region40: #{tpu_custom_call.1} parent=11 // pred_fallthru
          _
      $region12: #{tpu_custom_call.1} parent=5 // pred_fallthru
        _
      %p346 = scmp.lt.s32.totalorder %s25, 7
      // Predicated region
      $region41: #{tpu_custom_call.1} parent=5 // pred_check
        %p347 = pneg %p346
      $region42: #{tpu_custom_call.1} parent=5 // pred_check_branch
        %349 = sbr.rel (%p347) target = $region44
      $region43: #{tpu_custom_call.1} parent=5 // pred_region
        // Predicated region
        $region45: #{tpu_custom_call.1} parent=43 // pred_check
          %p350 = pneg %p192
        $region46: #{tpu_custom_call.1} parent=43 // pred_check_branch
          %352 = sbr.rel (%p350) target = $region48
        $region47: #{tpu_custom_call.1} parent=43 // pred_region
          %s353 = sand.u32 %s25, 1
          %s354 = scalar_lea.sflag [#allocation15], %s353
          %s355 = sand.u32 %s182, 1
          %s356 = smul.addr %s355, 1280
          %s357 = scalar_lea.vmem [#allocation14], %s356
          %s358 = smul.u32 10, %s25
          %s360 = ssub.s32 20480, 20480
          %361 = vsyncadd %s354, %s360
          %s362 = smul.addr %s358, 64
          %s363 = scalar_lea.hbm %s7, %s362
          %s364 = sshll.u32 %s357, 4
          %s365 = int_to_ptr.vmem [resolvable:$true] %s364
          %370 = dma.hbm_to_vmem [thread:$0]  %s363, 20480, %s365, %s354, 4480, 640, 40
        $region48: #{tpu_custom_call.1} parent=43 // pred_fallthru
          _
        // Predicated region
        $region49: #{tpu_custom_call.1} parent=43 // pred_check
          %p371 = pneg %p218
        $region50: #{tpu_custom_call.1} parent=43 // pred_check_branch
          %373 = sbr.rel (%p371) target = $region52
        $region51: #{tpu_custom_call.1} parent=43 // pred_region
          %s374 = sand.u32 %s25, 1
          %s375 = scalar_lea.sflag [#allocation15], %s374
          %s376 = sand.u32 %s208, 1
          %s377 = smul.addr %s376, 10
          %s378 = scalar_lea.vmem [#allocation16], %s377
          %s379 = smul.u32 10, %s25
          %s381 = ssub.s32 160, 160
          %382 = vsyncadd %s375, %s381
          %s383 = smul.addr %s379, 16
          %s384 = scalar_lea.hbm %s8, %s383
          %s386 = sshll.u32 %s378, 4
          %s387 = int_to_ptr.vmem [resolvable:$true] %s386
          %389 = dma.hbm_to_vmem [thread:$0]  %s384, 160, %s387, %s375
        $region52: #{tpu_custom_call.1} parent=43 // pred_fallthru
          _
      $region44: #{tpu_custom_call.1} parent=5 // pred_fallthru
        _
      %p390 = scmp.le.s32.totalorder 1, %s25
      %p391 = scmp.lt.s32.totalorder %s25, 8
      %p392 = pnand %p390, %p391
      %p393 = pneg %p392
      // Predicated region
      $region53: #{tpu_custom_call.1} parent=5 // pred_check
        _
      $region54: #{tpu_custom_call.1} parent=5 // pred_check_branch
        %395 = sbr.rel (%p392) target = $region56
      $region55: #{tpu_custom_call.1} parent=5 // pred_region
        %s396 = ssub.s32 %s25, 1
        // Predicated region
        $region57: #{tpu_custom_call.1} parent=55 // pred_check
          %p397 = pneg %p46
        $region58: #{tpu_custom_call.1} parent=55 // pred_check_branch
          %399 = sbr.rel (%p397) target = $region60
        $region59: #{tpu_custom_call.1} parent=55 // pred_region
          %400 = dma.done [#allocation3], 128
        $region60: #{tpu_custom_call.1} parent=55 // pred_fallthru
          _
        // Predicated region
        $region61: #{tpu_custom_call.1} parent=55 // pred_check
          %p401 = pneg %p67
        $region62: #{tpu_custom_call.1} parent=55 // pred_check_branch
          %403 = sbr.rel (%p401) target = $region64
        $region63: #{tpu_custom_call.1} parent=55 // pred_region
          %404 = dma.done [#allocation6], 384
        $region64: #{tpu_custom_call.1} parent=55 // pred_fallthru
          _
        // Predicated region
        $region65: #{tpu_custom_call.1} parent=55 // pred_check
          %p405 = pneg %p88
        $region66: #{tpu_custom_call.1} parent=55 // pred_check_branch
          %407 = sbr.rel (%p405) target = $region68
        $region67: #{tpu_custom_call.1} parent=55 // pred_region
          %408 = dma.done [#allocation6], 16
        $region68: #{tpu_custom_call.1} parent=55 // pred_fallthru
          _
        // Predicated region
        $region69: #{tpu_custom_call.1} parent=55 // pred_check
          %p409 = pneg %p109
        $region70: #{tpu_custom_call.1} parent=55 // pred_check_branch
          %411 = sbr.rel (%p409) target = $region72
        $region71: #{tpu_custom_call.1} parent=55 // pred_region
          %412 = dma.done [#allocation9], 4096
        $region72: #{tpu_custom_call.1} parent=55 // pred_fallthru
          _
        // Predicated region
        $region73: #{tpu_custom_call.1} parent=55 // pred_check
          %p413 = pneg %p130
        $region74: #{tpu_custom_call.1} parent=55 // pred_check_branch
          %415 = sbr.rel (%p413) target = $region76
        $region75: #{tpu_custom_call.1} parent=55 // pred_region
          %416 = dma.done [#allocation9], 32
        $region76: #{tpu_custom_call.1} parent=55 // pred_fallthru
          _
        // Predicated region
        $region77: #{tpu_custom_call.1} parent=55 // pred_check
          %p417 = pneg %p151
        $region78: #{tpu_custom_call.1} parent=55 // pred_check_branch
          %419 = sbr.rel (%p417) target = $region80
        $region79: #{tpu_custom_call.1} parent=55 // pred_region
          %420 = dma.done [#allocation12], 32
        $region80: #{tpu_custom_call.1} parent=55 // pred_fallthru
          _
        // Predicated region
        $region81: #{tpu_custom_call.1} parent=55 // pred_check
          %p421 = pneg %p172
        $region82: #{tpu_custom_call.1} parent=55 // pred_check_branch
          %423 = sbr.rel (%p421) target = $region84
        $region83: #{tpu_custom_call.1} parent=55 // pred_region
          %424 = dma.done [#allocation12], 32
        $region84: #{tpu_custom_call.1} parent=55 // pred_fallthru
          _
        %s425 = sand.u32 %s30, 1
        %s426 = scalar_lea.sflag [#allocation15], %s425
        %s427 = sand.u32 %s185, 1
        %s428 = smul.addr %s427, 1280
        %s429 = scalar_lea.vmem [#allocation14], %s428
        // Predicated region
        $region85: #{tpu_custom_call.1} parent=55 // pred_check
          %p430 = pneg %p198
        $region86: #{tpu_custom_call.1} parent=55 // pred_check_branch
          %432 = sbr.rel (%p430) target = $region88
        $region87: #{tpu_custom_call.1} parent=55 // pred_region
          %433 = dma.done %s426, 20480
        $region88: #{tpu_custom_call.1} parent=55 // pred_fallthru
          _
        %s434 = sand.u32 %s30, 1
        %s435 = scalar_lea.sflag [#allocation15], %s434
        %s436 = sand.u32 %s211, 1
        %s437 = smul.addr %s436, 10
        %s438 = scalar_lea.vmem [#allocation16], %s437
        // Predicated region
        $region89: #{tpu_custom_call.1} parent=55 // pred_check
          %p439 = pneg %p224
        $region90: #{tpu_custom_call.1} parent=55 // pred_check_branch
          %441 = sbr.rel (%p439) target = $region92
        $region91: #{tpu_custom_call.1} parent=55 // pred_region
          %442 = dma.done %s435, 160
        $region92: #{tpu_custom_call.1} parent=55 // pred_fallthru
          _
        %p443 = pneg %p46
        %p444 = pneg %p43
        %p445 = pneg %p67
        %p446 = pneg %p64
        %p447 = pneg %p88
        %p448 = pneg %p85
        %p449 = pneg %p109
        %p450 = pneg %p106
        %p451 = pneg %p130
        %p452 = pneg %p127
        %p453 = pneg %p151
        %p454 = pneg %p148
        %p455 = pneg %p172
        %p456 = pneg %p169
        %s457 = sand.u32 %s30, 1
        %s458 = scalar_lea.sflag [#allocation15], %s457
        %s459 = sand.u32 %s185, 1
        %s460 = smul.addr %s459, 1280
        %s461 = scalar_lea.vmem [#allocation14], %s460
        %p462 = pneg %p198
        %p463 = pneg %p195
        %s464 = sand.u32 %s30, 1
        %s465 = scalar_lea.sflag [#allocation15], %s464
        %s466 = sand.u32 %s211, 1
        %s467 = smul.addr %s466, 10
        %s468 = scalar_lea.vmem [#allocation16], %s467
        %p469 = pneg %p224
        %p470 = pneg %p221
        %p471 = pneg %p250
        %p472 = pneg %p247
        %s473 = sand.u32 %s237, 1
        %s474 = scalar_lea.sflag [#allocation4], %s473
        %s475 = sand.u32 %s237, 1
        %s476 = smul.addr %s475, 80
        %s477 = scalar_lea.vmem [#allocation17], %s476
        %s478 = smul.u32 10, %s30
        %s479 = smul.u32 10, %s30
        %s480 = smul.u32 10, %s30
        %v481 = vld [vmem:[#allocation2] sm:$0xff]
        %v482 = vld [vmem:[#allocation5] sm:$0xff]
        %v483 = vld [vmem:[#allocation5 + $0x8] sm:$0xff]
        %v484 = vld [vmem:[#allocation5 + $0x10] sm:$0xff]
        %v485 = vld [vmem:[#allocation7] sm:$0x1]
        %v487 = vlaneseq
        %v488 = vshrl.u32 %v487, 7
        %v489 = vsub.s32 0, %v488
        %v490 = vrot.slane %v485, %v489
        %vm492 = vcmask 195584
        %v494 = vsel %vm492, %v481, 0
        %496 = vmatprep.subr.mxu0 0.0
        %497 = vmatpush1.msra.mxu0 %v482
        %498 = vmatprep.subr.mxu0 0.0
        %499 = vmatpush1.msra.mxu0 %v483
        %500 = vmatprep.subr.mxu0 0.0
        %501 = vmatpush1.msra.mxu0 %v484
        %502 = vmatprep.subr.mxu0 0.0
        %503 = vmatpush1.msra.mxu0 0.0
        %504 = vmatprep.subr.mxu0 0.0
        %505 = vmatpush1.msra.mxu0 0.0
        %506 = vmatprep.subr.mxu0 0.0
        %507 = vmatpush1.msra.mxu0 0.0
        %508 = vmatprep.subr.mxu0 0.0
        %509 = vmatpush1.msra.mxu0 0.0
        %510 = vmatprep.subr.mxu0 0.0
        %511 = vmatpush1.msra.mxu0 0.0
        %512 = vmatprep.subr.mxu0 0.0
        %513 = vmatpush1.msra.mxu0 0.0
        %514 = vmatprep.subr.mxu0 0.0
        %515 = vmatpush1.msra.mxu0 0.0
        %516 = vmatprep.subr.mxu0 0.0
        %517 = vmatpush1.msra.mxu0 0.0
        %518 = vmatprep.subr.mxu0 0.0
        %519 = vmatpush1.msra.mxu0 0.0
        %520 = vmatprep.subr.mxu0 0.0
        %521 = vmatpush1.msra.mxu0 0.0
        %522 = vmatprep.subr.mxu0 0.0
        %523 = vmatpush1.msra.mxu0 0.0
        %524 = vmatprep.subr.mxu0 0.0
        %525 = vmatpush1.msra.mxu0 0.0
        %526 = vmatprep.subr.mxu0 0.0
        %527 = vmatpush1.msra.mxu0 0.0
        %528 = vmatprep.subr.mxu0 0.0
        %529 = vmatpush1.msra.mxu0 0.0
        %530 = vmatprep.subr.mxu0 0.0
        %531 = vmatpush1.msra.mxu0 0.0
        %532 = vmatprep.subr.mxu0 0.0
        %533 = vmatpush1.msra.mxu0 0.0
        %534 = vmatprep.subr.mxu0 0.0
        %535 = vmatpush1.msra.mxu0 0.0
        %536 = vmatprep.subr.mxu0 0.0
        %537 = vmatpush1.msra.mxu0 0.0
        %538 = vmatprep.subr.mxu0 0.0
        %539 = vmatpush1.msra.mxu0 0.0
        %540 = vmatprep.subr.mxu0 0.0
        %541 = vmatpush1.msra.mxu0 0.0
        %542 = vmatprep.subr.mxu0 0.0
        %543 = vmatpush1.msra.mxu0 0.0
        %544 = vmatprep.subr.mxu0 0.0
        %545 = vmatpush1.msra.mxu0 0.0
        %546 = vmatprep.subr.mxu0 0.0
        %547 = vmatpush1.msra.mxu0 0.0
        %548 = vmatprep.subr.mxu0 0.0
        %549 = vmatpush1.msra.mxu0 0.0
        %550 = vmatprep.subr.mxu0 0.0
        %551 = vmatpush1.msra.mxu0 0.0
        %552 = vmatprep.subr.mxu0 0.0
        %553 = vmatpush1.msra.mxu0 0.0
        %554 = vmatprep.subr.mxu0 0.0
        %555 = vmatpush1.msra.mxu0 0.0
        %556 = vmatprep.subr.mxu0 0.0
        %557 = vmatpush1.msra.mxu0 0.0
        %558 = vmatprep.subr.mxu0 0.0
        %559 = vmatpush1.msra.mxu0 0.0
        %560 = vmatprep.mubr.f32.mxu0 0.0
        %561 = vmatmul.mubr.f32.gmra.mrb[0].mxu0 %v494
        %v562 = vpop.f32.mrb[0].mxu0
        %v563 = vadd.f32 %v490, %v562
        %v564 = vpop.f32.mrb[0].mxu0
        %565 = vdwg.mxu0
        %v566 = vmax.f32 %v563, 0.0
        %v567 = vld [vmem:[#allocation8] sm:$0xff]
        %v568 = vld [vmem:[#allocation8 + $0x8] sm:$0xff]
        %v569 = vld [vmem:[#allocation8 + $0x10] sm:$0xff]
        %v570 = vld [vmem:[#allocation8 + $0x18] sm:$0xff]
        %v571 = vld [vmem:[#allocation8 + $0x20] sm:$0xff]
        %v572 = vld [vmem:[#allocation8 + $0x28] sm:$0xff]
        %v573 = vld [vmem:[#allocation8 + $0x30] sm:$0xff]
        %v574 = vld [vmem:[#allocation8 + $0x38] sm:$0xff]
        %v575 = vld [vmem:[#allocation8 + $0x40] sm:$0xff]
        %v576 = vld [vmem:[#allocation8 + $0x48] sm:$0xff]
        %v577 = vld [vmem:[#allocation8 + $0x50] sm:$0xff]
        %v578 = vld [vmem:[#allocation8 + $0x58] sm:$0xff]
        %v579 = vld [vmem:[#allocation8 + $0x60] sm:$0xff]
        %v580 = vld [vmem:[#allocation8 + $0x68] sm:$0xff]
        %v581 = vld [vmem:[#allocation8 + $0x70] sm:$0xff]
        %v582 = vld [vmem:[#allocation8 + $0x78] sm:$0xff]
        %v583 = vld [vmem:[#allocation8 + $0x80] sm:$0xff]
        %v584 = vld [vmem:[#allocation8 + $0x88] sm:$0xff]
        %v585 = vld [vmem:[#allocation8 + $0x90] sm:$0xff]
        %v586 = vld [vmem:[#allocation8 + $0x98] sm:$0xff]
        %v587 = vld [vmem:[#allocation8 + $0xa0] sm:$0xff]
        %v588 = vld [vmem:[#allocation8 + $0xa8] sm:$0xff]
        %v589 = vld [vmem:[#allocation8 + $0xb0] sm:$0xff]
        %v590 = vld [vmem:[#allocation8 + $0xb8] sm:$0xff]
        %v591 = vld [vmem:[#allocation8 + $0xc0] sm:$0xff]
        %v592 = vld [vmem:[#allocation8 + $0xc8] sm:$0xff]
        %v593 = vld [vmem:[#allocation8 + $0xd0] sm:$0xff]
        %v594 = vld [vmem:[#allocation8 + $0xd8] sm:$0xff]
        %v595 = vld [vmem:[#allocation8 + $0xe0] sm:$0xff]
        %v596 = vld [vmem:[#allocation8 + $0xe8] sm:$0xff]
        %v597 = vld [vmem:[#allocation8 + $0xf0] sm:$0xff]
        %v598 = vld [vmem:[#allocation8 + $0xf8] sm:$0xff]
        %v599 = vld [vmem:[#allocation10] sm:$0x3]
        %v601 = vlaneseq
        %v602 = vshrl.u32 %v601, 7
        %v603 = vsub.s32 0, %v602
        %v604 = vrot.slane %v599, %v603
        %v605 = vlaneseq
        %v606 = vshrl.u32 %v605, 7
        %v607 = vsub.s32 1, %v606
        %v608 = vrot.slane %v599, %v607
        %611 = vmatprep.subr.mxu0 %v568
        %612 = vmatpush1.msra.mxu0 %v567
        %613 = vmatprep.subr.mxu0 %v570
        %614 = vmatpush1.msra.mxu0 %v569
        %615 = vmatprep.subr.mxu0 %v572
        %616 = vmatpush1.msra.mxu0 %v571
        %617 = vmatprep.subr.mxu0 %v574
        %618 = vmatpush1.msra.mxu0 %v573
        %619 = vmatprep.subr.mxu0 %v576
        %620 = vmatpush1.msra.mxu0 %v575
        %621 = vmatprep.subr.mxu0 %v578
        %622 = vmatpush1.msra.mxu0 %v577
        %623 = vmatprep.subr.mxu0 %v580
        %624 = vmatpush1.msra.mxu0 %v579
        %625 = vmatprep.subr.mxu0 %v582
        %626 = vmatpush1.msra.mxu0 %v581
        %627 = vmatprep.subr.mxu0 %v584
        %628 = vmatpush1.msra.mxu0 %v583
        %629 = vmatprep.subr.mxu0 %v586
        %630 = vmatpush1.msra.mxu0 %v585
        %631 = vmatprep.subr.mxu0 %v588
        %632 = vmatpush1.msra.mxu0 %v587
        %633 = vmatprep.subr.mxu0 %v590
        %634 = vmatpush1.msra.mxu0 %v589
        %635 = vmatprep.subr.mxu0 %v592
        %636 = vmatpush1.msra.mxu0 %v591
        %637 = vmatprep.subr.mxu0 %v594
        %638 = vmatpush1.msra.mxu0 %v593
        %639 = vmatprep.subr.mxu0 %v596
        %640 = vmatpush1.msra.mxu0 %v595
        %641 = vmatprep.subr.mxu0 %v598
        %642 = vmatpush1.msra.mxu0 %v597
        %643 = vmatprep.subr.mxu0 0.0
        %644 = vmatpush1.msra.mxu0 0.0
        %645 = vmatprep.subr.mxu0 0.0
        %646 = vmatpush1.msra.mxu0 0.0
        %647 = vmatprep.subr.mxu0 0.0
        %648 = vmatpush1.msra.mxu0 0.0
        %649 = vmatprep.subr.mxu0 0.0
        %650 = vmatpush1.msra.mxu0 0.0
        %651 = vmatprep.subr.mxu0 0.0
        %652 = vmatpush1.msra.mxu0 0.0
        %653 = vmatprep.subr.mxu0 0.0
        %654 = vmatpush1.msra.mxu0 0.0
        %655 = vmatprep.subr.mxu0 0.0
        %656 = vmatpush1.msra.mxu0 0.0
        %657 = vmatprep.subr.mxu0 0.0
        %658 = vmatpush1.msra.mxu0 0.0
        %659 = vmatprep.subr.mxu0 0.0
        %660 = vmatpush1.msra.mxu0 0.0
        %661 = vmatprep.subr.mxu0 0.0
        %662 = vmatpush1.msra.mxu0 0.0
        %663 = vmatprep.subr.mxu0 0.0
        %664 = vmatpush1.msra.mxu0 0.0
        %665 = vmatprep.subr.mxu0 0.0
        %666 = vmatpush1.msra.mxu0 0.0
        %667 = vmatprep.subr.mxu0 0.0
        %668 = vmatpush1.msra.mxu0 0.0
        %669 = vmatprep.subr.mxu0 0.0
        %670 = vmatpush1.msra.mxu0 0.0
        %671 = vmatprep.subr.mxu0 0.0
        %672 = vmatpush1.msra.mxu0 0.0
        %673 = vmatprep.subr.mxu0 0.0
        %674 = vmatpush1.msra.mxu0 0.0
        %675 = vmatprep.mubr.f32.mxu0 0.0
        %676 = vmatmul.mubr.f32.gmra.mrb[0].mxu0 %v566
        %v677 = vpop.f32.mrb[0].mxu0
        %v678 = vadd.f32 %v604, %v677
        %v679 = vpop.f32.mrb[0].mxu0
        %v680 = vadd.f32 %v608, %v679
        %681 = vdwg.mxu0
        %v682 = vrot.slane %v678, 4
        %v683 = vadd.f32 %v678, %v682
        %v684 = vrot.slane %v683, 2
        %v685 = vadd.f32 %v683, %v684
        %v686 = vrot.slane %v685, 1
        %v687 = vadd.f32 %v685, %v686
        %v688 = vrot.slane %v680, 4
        %v689 = vadd.f32 %v680, %v688
        %v690 = vrot.slane %v689, 2
        %v691 = vadd.f32 %v689, %v690
        %v692 = vrot.slane %v691, 1
        %v693 = vadd.f32 %v691, %v692
        %v694 = vrcp.pop 8.0
        %v695 = vmul.f32 %v687, %v694
        %v696 = vmul.f32 %v693, %v694
        %v697 = vsub.f32 %v678, %v695
        %v698 = vsub.f32 %v680, %v696
        %v699 = vmul.f32 %v697, %v697
        %v700 = vmul.f32 %v698, %v698
        %v701 = vrot.slane %v699, 4
        %v702 = vadd.f32 %v699, %v701
        %v703 = vrot.slane %v702, 2
        %v704 = vadd.f32 %v702, %v703
        %v705 = vrot.slane %v704, 1
        %v706 = vadd.f32 %v704, %v705
        %v707 = vrot.slane %v700, 4
        %v708 = vadd.f32 %v700, %v707
        %v709 = vrot.slane %v708, 2
        %v710 = vadd.f32 %v708, %v709
        %v711 = vrot.slane %v710, 1
        %v712 = vadd.f32 %v710, %v711
        %v713 = vmul.f32 %v706, %v694
        %v714 = vmul.f32 %v712, %v694
        %v715 = vadd.f32 %v713, 1e-05
        %v716 = vadd.f32 %v714, 1e-05
        %v717 = vrsqrt.pop %v715
        %v718 = vrsqrt.pop %v716
        %v719 = vmul.f32 %v697, %v717
        %v720 = vmul.f32 %v698, %v718
        %v721 = vld [vmem:[#allocation11] sm:$0x3]
        %v723 = vlaneseq
        %v724 = vshrl.u32 %v723, 7
        %v725 = vsub.s32 0, %v724
        %v726 = vrot.slane %v721, %v725
        %v727 = vlaneseq
        %v728 = vshrl.u32 %v727, 7
        %v729 = vsub.s32 1, %v728
        %v730 = vrot.slane %v721, %v729
        %v733 = vmul.f32 %v719, %v726
        %v734 = vmul.f32 %v720, %v730
        %v735 = vld [vmem:[#allocation13] sm:$0x3]
        %v737 = vlaneseq
        %v738 = vshrl.u32 %v737, 7
        %v739 = vsub.s32 0, %v738
        %v740 = vrot.slane %v735, %v739
        %v741 = vlaneseq
        %v742 = vshrl.u32 %v741, 7
        %v743 = vsub.s32 1, %v742
        %v744 = vrot.slane %v735, %v743
        %v747 = vadd.f32 %v733, %v740
        %v748 = vadd.f32 %v734, %v744
        %v749 = vmax.f32 %v747, 0.0
        %v750 = vmax.f32 %v748, 0.0
        %v751 = vpack.c.bf16 %v749, %v749
        %v752 = vpack.c.bf16 %v750, %v750
        %v753 = vld [vmem:[%s429] sm:$0xff]
        %v754 = vld [vmem:[%s429 + $0x8] sm:$0xff]
        %v755 = vld [vmem:[%s429 + $0x10] sm:$0xff]
        %v756 = vld [vmem:[%s429 + $0x18] sm:$0xff]
        %v757 = vld [vmem:[%s429 + $0x20] sm:$0xff]
        %v758 = vld [vmem:[%s429 + $0x28] sm:$0xff]
        %v759 = vld [vmem:[%s429 + $0x30] sm:$0xff]
        %v760 = vld [vmem:[%s429 + $0x38] sm:$0xff]
        %v761 = vld [vmem:[%s429 + $0x40] sm:$0xff]
        %v762 = vld [vmem:[%s429 + $0x48] sm:$0xff]
        %v763 = vld [vmem:[%s429 + $0x50] sm:$0xff]
        %v764 = vld [vmem:[%s429 + $0x58] sm:$0xff]
        %v765 = vld [vmem:[%s429 + $0x60] sm:$0xff]
        %v766 = vld [vmem:[%s429 + $0x68] sm:$0xff]
        %v767 = vld [vmem:[%s429 + $0x70] sm:$0xff]
        %v768 = vld [vmem:[%s429 + $0x78] sm:$0xff]
        %v769 = vld [vmem:[%s429 + $0x80] sm:$0xff]
        %v770 = vld [vmem:[%s429 + $0x88] sm:$0xff]
        %v771 = vld [vmem:[%s429 + $0x90] sm:$0xff]
        %v772 = vld [vmem:[%s429 + $0x98] sm:$0xff]
        %v773 = vld [vmem:[%s429 + $0xa0] sm:$0xff]
        %v774 = vld [vmem:[%s429 + $0xa8] sm:$0xff]
        %v775 = vld [vmem:[%s429 + $0xb0] sm:$0xff]
        %v776 = vld [vmem:[%s429 + $0xb8] sm:$0xff]
        %v777 = vld [vmem:[%s429 + $0xc0] sm:$0xff]
        %v778 = vld [vmem:[%s429 + $0xc8] sm:$0xff]
        %v779 = vld [vmem:[%s429 + $0xd0] sm:$0xff]
        %v780 = vld [vmem:[%s429 + $0xd8] sm:$0xff]
        %v781 = vld [vmem:[%s429 + $0xe0] sm:$0xff]
        %v782 = vld [vmem:[%s429 + $0xe8] sm:$0xff]
        %v783 = vld [vmem:[%s429 + $0xf0] sm:$0xff]
        %v784 = vld [vmem:[%s429 + $0xf8] sm:$0xff]
        %v785 = vld [vmem:[%s429 + $0x100] sm:$0xff]
        %v786 = vld [vmem:[%s429 + $0x108] sm:$0xff]
        %v787 = vld [vmem:[%s429 + $0x110] sm:$0xff]
        %v788 = vld [vmem:[%s429 + $0x118] sm:$0xff]
        %v789 = vld [vmem:[%s429 + $0x120] sm:$0xff]
        %v790 = vld [vmem:[%s429 + $0x128] sm:$0xff]
        %v791 = vld [vmem:[%s429 + $0x130] sm:$0xff]
        %v792 = vld [vmem:[%s429 + $0x138] sm:$0xff]
        %v793 = vld [vmem:[%s429 + $0x140] sm:$0xff]
        %v794 = vld [vmem:[%s429 + $0x148] sm:$0xff]
        %v795 = vld [vmem:[%s429 + $0x150] sm:$0xff]
        %v796 = vld [vmem:[%s429 + $0x158] sm:$0xff]
        %v797 = vld [vmem:[%s429 + $0x160] sm:$0xff]
        %v798 = vld [vmem:[%s429 + $0x168] sm:$0xff]
        %v799 = vld [vmem:[%s429 + $0x170] sm:$0xff]
        %v800 = vld [vmem:[%s429 + $0x178] sm:$0xff]
        %v801 = vld [vmem:[%s429 + $0x180] sm:$0xff]
        %v802 = vld [vmem:[%s429 + $0x188] sm:$0xff]
        %v803 = vld [vmem:[%s429 + $0x190] sm:$0xff]
        %v804 = vld [vmem:[%s429 + $0x198] sm:$0xff]
        %v805 = vld [vmem:[%s429 + $0x1a0] sm:$0xff]
        %v806 = vld [vmem:[%s429 + $0x1a8] sm:$0xff]
        %v807 = vld [vmem:[%s429 + $0x1b0] sm:$0xff]
        %v808 = vld [vmem:[%s429 + $0x1b8] sm:$0xff]
        %v809 = vld [vmem:[%s429 + $0x1c0] sm:$0xff]
        %v810 = vld [vmem:[%s429 + $0x1c8] sm:$0xff]
        %v811 = vld [vmem:[%s429 + $0x1d0] sm:$0xff]
        %v812 = vld [vmem:[%s429 + $0x1d8] sm:$0xff]
        %v813 = vld [vmem:[%s429 + $0x1e0] sm:$0xff]
        %v814 = vld [vmem:[%s429 + $0x1e8] sm:$0xff]
        %v815 = vld [vmem:[%s429 + $0x1f0] sm:$0xff]
        %v816 = vld [vmem:[%s429 + $0x1f8] sm:$0xff]
        %v817 = vld [vmem:[%s429 + $0x200] sm:$0xff]
        %v818 = vld [vmem:[%s429 + $0x208] sm:$0xff]
        %v819 = vld [vmem:[%s429 + $0x210] sm:$0xff]
        %v820 = vld [vmem:[%s429 + $0x218] sm:$0xff]
        %v821 = vld [vmem:[%s429 + $0x220] sm:$0xff]
        %v822 = vld [vmem:[%s429 + $0x228] sm:$0xff]
        %v823 = vld [vmem:[%s429 + $0x230] sm:$0xff]
        %v824 = vld [vmem:[%s429 + $0x238] sm:$0xff]
        %v825 = vld [vmem:[%s429 + $0x240] sm:$0xff]
        %v826 = vld [vmem:[%s429 + $0x248] sm:$0xff]
        %v827 = vld [vmem:[%s429 + $0x250] sm:$0xff]
        %v828 = vld [vmem:[%s429 + $0x258] sm:$0xff]
        %v829 = vld [vmem:[%s429 + $0x260] sm:$0xff]
        %v830 = vld [vmem:[%s429 + $0x268] sm:$0xff]
        %v831 = vld [vmem:[%s429 + $0x270] sm:$0xff]
        %v832 = vld [vmem:[%s429 + $0x278] sm:$0xff]
        %v833 = vld [vmem:[%s429 + $0x280] sm:$0xff]
        %v834 = vld [vmem:[%s429 + $0x288] sm:$0xff]
        %v835 = vld [vmem:[%s429 + $0x290] sm:$0xff]
        %v836 = vld [vmem:[%s429 + $0x298] sm:$0xff]
        %v837 = vld [vmem:[%s429 + $0x2a0] sm:$0xff]
        %v838 = vld [vmem:[%s429 + $0x2a8] sm:$0xff]
        %v839 = vld [vmem:[%s429 + $0x2b0] sm:$0xff]
        %v840 = vld [vmem:[%s429 + $0x2b8] sm:$0xff]
        %v841 = vld [vmem:[%s429 + $0x2c0] sm:$0xff]
        %v842 = vld [vmem:[%s429 + $0x2c8] sm:$0xff]
        %v843 = vld [vmem:[%s429 + $0x2d0] sm:$0xff]
        %v844 = vld [vmem:[%s429 + $0x2d8] sm:$0xff]
        %v845 = vld [vmem:[%s429 + $0x2e0] sm:$0xff]
        %v846 = vld [vmem:[%s429 + $0x2e8] sm:$0xff]
        %v847 = vld [vmem:[%s429 + $0x2f0] sm:$0xff]
        %v848 = vld [vmem:[%s429 + $0x2f8] sm:$0xff]
        %v849 = vld [vmem:[%s429 + $0x300] sm:$0xff]
        %v850 = vld [vmem:[%s429 + $0x308] sm:$0xff]
        %v851 = vld [vmem:[%s429 + $0x310] sm:$0xff]
        %v852 = vld [vmem:[%s429 + $0x318] sm:$0xff]
        %v853 = vld [vmem:[%s429 + $0x320] sm:$0xff]
        %v854 = vld [vmem:[%s429 + $0x328] sm:$0xff]
        %v855 = vld [vmem:[%s429 + $0x330] sm:$0xff]
        %v856 = vld [vmem:[%s429 + $0x338] sm:$0xff]
        %v857 = vld [vmem:[%s429 + $0x340] sm:$0xff]
        %v858 = vld [vmem:[%s429 + $0x348] sm:$0xff]
        %v859 = vld [vmem:[%s429 + $0x350] sm:$0xff]
        %v860 = vld [vmem:[%s429 + $0x358] sm:$0xff]
        %v861 = vld [vmem:[%s429 + $0x360] sm:$0xff]
        %v862 = vld [vmem:[%s429 + $0x368] sm:$0xff]
        %v863 = vld [vmem:[%s429 + $0x370] sm:$0xff]
        %v864 = vld [vmem:[%s429 + $0x378] sm:$0xff]
        %v865 = vld [vmem:[%s429 + $0x380] sm:$0xff]
        %v866 = vld [vmem:[%s429 + $0x388] sm:$0xff]
        %v867 = vld [vmem:[%s429 + $0x390] sm:$0xff]
        %v868 = vld [vmem:[%s429 + $0x398] sm:$0xff]
        %v869 = vld [vmem:[%s429 + $0x3a0] sm:$0xff]
        %v870 = vld [vmem:[%s429 + $0x3a8] sm:$0xff]
        %v871 = vld [vmem:[%s429 + $0x3b0] sm:$0xff]
        %v872 = vld [vmem:[%s429 + $0x3b8] sm:$0xff]
        %v873 = vld [vmem:[%s429 + $0x3c0] sm:$0xff]
        %v874 = vld [vmem:[%s429 + $0x3c8] sm:$0xff]
        %v875 = vld [vmem:[%s429 + $0x3d0] sm:$0xff]
        %v876 = vld [vmem:[%s429 + $0x3d8] sm:$0xff]
        %v877 = vld [vmem:[%s429 + $0x3e0] sm:$0xff]
        %v878 = vld [vmem:[%s429 + $0x3e8] sm:$0xff]
        %v879 = vld [vmem:[%s429 + $0x3f0] sm:$0xff]
        %v880 = vld [vmem:[%s429 + $0x3f8] sm:$0xff]
        %v881 = vld [vmem:[%s429 + $0x400] sm:$0xff]
        %v882 = vld [vmem:[%s429 + $0x408] sm:$0xff]
        %v883 = vld [vmem:[%s429 + $0x410] sm:$0xff]
        %v884 = vld [vmem:[%s429 + $0x418] sm:$0xff]
        %v885 = vld [vmem:[%s429 + $0x420] sm:$0xff]
        %v886 = vld [vmem:[%s429 + $0x428] sm:$0xff]
        %v887 = vld [vmem:[%s429 + $0x430] sm:$0xff]
        %v888 = vld [vmem:[%s429 + $0x438] sm:$0xff]
        %v889 = vld [vmem:[%s429 + $0x440] sm:$0xff]
        %v890 = vld [vmem:[%s429 + $0x448] sm:$0xff]
        %v891 = vld [vmem:[%s429 + $0x450] sm:$0xff]
        %v892 = vld [vmem:[%s429 + $0x458] sm:$0xff]
        %v893 = vld [vmem:[%s429 + $0x460] sm:$0xff]
        %v894 = vld [vmem:[%s429 + $0x468] sm:$0xff]
        %v895 = vld [vmem:[%s429 + $0x470] sm:$0xff]
        %v896 = vld [vmem:[%s429 + $0x478] sm:$0xff]
        %v897 = vld [vmem:[%s429 + $0x480] sm:$0xff]
        %v898 = vld [vmem:[%s429 + $0x488] sm:$0xff]
        %v899 = vld [vmem:[%s429 + $0x490] sm:$0xff]
        %v900 = vld [vmem:[%s429 + $0x498] sm:$0xff]
        %v901 = vld [vmem:[%s429 + $0x4a0] sm:$0xff]
        %v902 = vld [vmem:[%s429 + $0x4a8] sm:$0xff]
        %v903 = vld [vmem:[%s429 + $0x4b0] sm:$0xff]
        %v904 = vld [vmem:[%s429 + $0x4b8] sm:$0xff]
        %v905 = vld [vmem:[%s429 + $0x4c0] sm:$0xff]
        %v906 = vld [vmem:[%s429 + $0x4c8] sm:$0xff]
        %v907 = vld [vmem:[%s429 + $0x4d0] sm:$0xff]
        %v908 = vld [vmem:[%s429 + $0x4d8] sm:$0xff]
        %v909 = vld [vmem:[%s429 + $0x4e0] sm:$0xff]
        %v910 = vld [vmem:[%s429 + $0x4e8] sm:$0xff]
        %v911 = vld [vmem:[%s429 + $0x4f0] sm:$0xff]
        %v912 = vld [vmem:[%s429 + $0x4f8] sm:$0xff]
        %v913 = vld [vmem:[%s438] sm:$0xff]
        %v914 = vld [vmem:[%s438 + $0x8] sm:$0x3]
        %v917 = vlaneseq
        %v918 = vshrl.u32 %v917, 7
        %v919 = vsub.s32 0, %v918
        %v920 = vrot.slane %v913, %v919
        %v921 = vlaneseq
        %v922 = vshrl.u32 %v921, 7
        %v923 = vsub.s32 1, %v922
        %v924 = vrot.slane %v913, %v923
        %v925 = vlaneseq
        %v926 = vshrl.u32 %v925, 7
        %v927 = vsub.s32 2, %v926
        %v928 = vrot.slane %v913, %v927
        %v929 = vlaneseq
        %v930 = vshrl.u32 %v929, 7
        %v931 = vsub.s32 3, %v930
        %v932 = vrot.slane %v913, %v931
        %v933 = vlaneseq
        %v934 = vshrl.u32 %v933, 7
        %v935 = vsub.s32 4, %v934
        %v936 = vrot.slane %v913, %v935
        %v937 = vlaneseq
        %v938 = vshrl.u32 %v937, 7
        %v939 = vsub.s32 5, %v938
        %v940 = vrot.slane %v913, %v939
        %v941 = vlaneseq
        %v942 = vshrl.u32 %v941, 7
        %v943 = vsub.s32 6, %v942
        %v944 = vrot.slane %v913, %v943
        %v945 = vlaneseq
        %v946 = vshrl.u32 %v945, 7
        %v947 = vsub.s32 7, %v946
        %v948 = vrot.slane %v913, %v947
        %v949 = vlaneseq
        %v950 = vshrl.u32 %v949, 7
        %v951 = vsub.s32 0, %v950
        %v952 = vrot.slane %v914, %v951
        %v953 = vlaneseq
        %v954 = vshrl.u32 %v953, 7
        %v955 = vsub.s32 1, %v954
        %v956 = vrot.slane %v914, %v955
        %v1127 = vunpack.c.l.b16 %v753
        %v1128 = vunpack.c.h.b16 %v753
        %v1129 = vunpack.c.l.b16 %v754
        %v1130 = vunpack.c.h.b16 %v754
        %v1131 = vunpack.c.l.b16 %v755
        %v1132 = vunpack.c.h.b16 %v755
        %v1133 = vunpack.c.l.b16 %v756
        %v1134 = vunpack.c.h.b16 %v756
        %v1135 = vunpack.c.l.b16 %v757
        %v1136 = vunpack.c.h.b16 %v757
        %v1137 = vunpack.c.l.b16 %v758
        %v1138 = vunpack.c.h.b16 %v758
        %v1139 = vunpack.c.l.b16 %v759
        %v1140 = vunpack.c.h.b16 %v759
        %v1141 = vunpack.c.l.b16 %v760
        %v1142 = vunpack.c.h.b16 %v760
        %v1143 = vunpack.c.l.b16 %v761
        %v1144 = vunpack.c.h.b16 %v761
        %v1145 = vunpack.c.l.b16 %v762
        %v1146 = vunpack.c.h.b16 %v762
        %v1147 = vunpack.c.l.b16 %v763
        %v1148 = vunpack.c.h.b16 %v763
        %v1149 = vunpack.c.l.b16 %v764
        %v1150 = vunpack.c.h.b16 %v764
        %v1151 = vunpack.c.l.b16 %v765
        %v1152 = vunpack.c.h.b16 %v765
        %v1153 = vunpack.c.l.b16 %v766
        %v1154 = vunpack.c.h.b16 %v766
        %v1155 = vunpack.c.l.b16 %v767
        %v1156 = vunpack.c.h.b16 %v767
        %v1157 = vunpack.c.l.b16 %v768
        %v1158 = vunpack.c.h.b16 %v768
        %v1159 = vunpack.c.l.b16 %v769
        %v1160 = vunpack.c.h.b16 %v769
        %v1161 = vunpack.c.l.b16 %v770
        %v1162 = vunpack.c.h.b16 %v770
        %v1163 = vunpack.c.l.b16 %v771
        %v1164 = vunpack.c.h.b16 %v771
        %v1165 = vunpack.c.l.b16 %v772
        %v1166 = vunpack.c.h.b16 %v772
        %v1167 = vunpack.c.l.b16 %v773
        %v1168 = vunpack.c.h.b16 %v773
        %v1169 = vunpack.c.l.b16 %v774
        %v1170 = vunpack.c.h.b16 %v774
        %v1171 = vunpack.c.l.b16 %v775
        %v1172 = vunpack.c.h.b16 %v775
        %v1173 = vunpack.c.l.b16 %v776
        %v1174 = vunpack.c.h.b16 %v776
        %v1175 = vunpack.c.l.b16 %v777
        %v1176 = vunpack.c.h.b16 %v777
        %v1177 = vunpack.c.l.b16 %v778
        %v1178 = vunpack.c.h.b16 %v778
        %v1179 = vunpack.c.l.b16 %v779
        %v1180 = vunpack.c.h.b16 %v779
        %v1181 = vunpack.c.l.b16 %v780
        %v1182 = vunpack.c.h.b16 %v780
        %v1183 = vunpack.c.l.b16 %v781
        %v1184 = vunpack.c.h.b16 %v781
        %v1185 = vunpack.c.l.b16 %v782
        %v1186 = vunpack.c.h.b16 %v782
        %v1187 = vunpack.c.l.b16 %v783
        %v1188 = vunpack.c.h.b16 %v783
        %v1189 = vunpack.c.l.b16 %v784
        %v1190 = vunpack.c.h.b16 %v784
        %v1191 = vunpack.c.l.b16 %v785
        %v1192 = vunpack.c.h.b16 %v785
        %v1193 = vunpack.c.l.b16 %v786
        %v1194 = vunpack.c.h.b16 %v786
        %v1195 = vunpack.c.l.b16 %v787
        %v1196 = vunpack.c.h.b16 %v787
        %v1197 = vunpack.c.l.b16 %v788
        %v1198 = vunpack.c.h.b16 %v788
        %v1199 = vunpack.c.l.b16 %v789
        %v1200 = vunpack.c.h.b16 %v789
        %v1201 = vunpack.c.l.b16 %v790
        %v1202 = vunpack.c.h.b16 %v790
        %v1203 = vunpack.c.l.b16 %v791
        %v1204 = vunpack.c.h.b16 %v791
        %v1205 = vunpack.c.l.b16 %v792
        %v1206 = vunpack.c.h.b16 %v792
        %v1207 = vunpack.c.l.b16 %v793
        %v1208 = vunpack.c.h.b16 %v793
        %v1209 = vunpack.c.l.b16 %v794
        %v1210 = vunpack.c.h.b16 %v794
        %v1211 = vunpack.c.l.b16 %v795
        %v1212 = vunpack.c.h.b16 %v795
        %v1213 = vunpack.c.l.b16 %v796
        %v1214 = vunpack.c.h.b16 %v796
        %v1215 = vunpack.c.l.b16 %v797
        %v1216 = vunpack.c.h.b16 %v797
        %v1217 = vunpack.c.l.b16 %v798
        %v1218 = vunpack.c.h.b16 %v798
        %v1219 = vunpack.c.l.b16 %v799
        %v1220 = vunpack.c.h.b16 %v799
        %v1221 = vunpack.c.l.b16 %v800
        %v1222 = vunpack.c.h.b16 %v800
        %v1223 = vunpack.c.l.b16 %v801
        %v1224 = vunpack.c.h.b16 %v801
        %v1225 = vunpack.c.l.b16 %v802
        %v1226 = vunpack.c.h.b16 %v802
        %v1227 = vunpack.c.l.b16 %v803
        %v1228 = vunpack.c.h.b16 %v803
        %v1229 = vunpack.c.l.b16 %v804
        %v1230 = vunpack.c.h.b16 %v804
        %v1231 = vunpack.c.l.b16 %v805
        %v1232 = vunpack.c.h.b16 %v805
        %v1233 = vunpack.c.l.b16 %v806
        %v1234 = vunpack.c.h.b16 %v806
        %v1235 = vunpack.c.l.b16 %v807
        %v1236 = vunpack.c.h.b16 %v807
        %v1237 = vunpack.c.l.b16 %v808
        %v1238 = vunpack.c.h.b16 %v808
        %v1239 = vunpack.c.l.b16 %v809
        %v1240 = vunpack.c.h.b16 %v809
        %v1241 = vunpack.c.l.b16 %v810
        %v1242 = vunpack.c.h.b16 %v810
        %v1243 = vunpack.c.l.b16 %v811
        %v1244 = vunpack.c.h.b16 %v811
        %v1245 = vunpack.c.l.b16 %v812
        %v1246 = vunpack.c.h.b16 %v812
        %v1247 = vunpack.c.l.b16 %v813
        %v1248 = vunpack.c.h.b16 %v813
        %v1249 = vunpack.c.l.b16 %v814
        %v1250 = vunpack.c.h.b16 %v814
        %v1251 = vunpack.c.l.b16 %v815
        %v1252 = vunpack.c.h.b16 %v815
        %v1253 = vunpack.c.l.b16 %v816
        %v1254 = vunpack.c.h.b16 %v816
        %v1255 = vunpack.c.l.b16 %v817
        %v1256 = vunpack.c.h.b16 %v817
        %v1257 = vunpack.c.l.b16 %v818
        %v1258 = vunpack.c.h.b16 %v818
        %v1259 = vunpack.c.l.b16 %v819
        %v1260 = vunpack.c.h.b16 %v819
        %v1261 = vunpack.c.l.b16 %v820
        %v1262 = vunpack.c.h.b16 %v820
        %v1263 = vunpack.c.l.b16 %v821
        %v1264 = vunpack.c.h.b16 %v821
        %v1265 = vunpack.c.l.b16 %v822
        %v1266 = vunpack.c.h.b16 %v822
        %v1267 = vunpack.c.l.b16 %v823
        %v1268 = vunpack.c.h.b16 %v823
        %v1269 = vunpack.c.l.b16 %v824
        %v1270 = vunpack.c.h.b16 %v824
        %v1271 = vunpack.c.l.b16 %v825
        %v1272 = vunpack.c.h.b16 %v825
        %v1273 = vunpack.c.l.b16 %v826
        %v1274 = vunpack.c.h.b16 %v826
        %v1275 = vunpack.c.l.b16 %v827
        %v1276 = vunpack.c.h.b16 %v827
        %v1277 = vunpack.c.l.b16 %v828
        %v1278 = vunpack.c.h.b16 %v828
        %v1279 = vunpack.c.l.b16 %v829
        %v1280 = vunpack.c.h.b16 %v829
        %v1281 = vunpack.c.l.b16 %v830
        %v1282 = vunpack.c.h.b16 %v830
        %v1283 = vunpack.c.l.b16 %v831
        %v1284 = vunpack.c.h.b16 %v831
        %v1285 = vunpack.c.l.b16 %v832
        %v1286 = vunpack.c.h.b16 %v832
        %v1287 = vunpack.c.l.b16 %v833
        %v1288 = vunpack.c.h.b16 %v833
        %v1289 = vunpack.c.l.b16 %v834
        %v1290 = vunpack.c.h.b16 %v834
        %v1291 = vunpack.c.l.b16 %v835
        %v1292 = vunpack.c.h.b16 %v835
        %v1293 = vunpack.c.l.b16 %v836
        %v1294 = vunpack.c.h.b16 %v836
        %v1295 = vunpack.c.l.b16 %v837
        %v1296 = vunpack.c.h.b16 %v837
        %v1297 = vunpack.c.l.b16 %v838
        %v1298 = vunpack.c.h.b16 %v838
        %v1299 = vunpack.c.l.b16 %v839
        %v1300 = vunpack.c.h.b16 %v839
        %v1301 = vunpack.c.l.b16 %v840
        %v1302 = vunpack.c.h.b16 %v840
        %v1303 = vunpack.c.l.b16 %v841
        %v1304 = vunpack.c.h.b16 %v841
        %v1305 = vunpack.c.l.b16 %v842
        %v1306 = vunpack.c.h.b16 %v842
        %v1307 = vunpack.c.l.b16 %v843
        %v1308 = vunpack.c.h.b16 %v843
        %v1309 = vunpack.c.l.b16 %v844
        %v1310 = vunpack.c.h.b16 %v844
        %v1311 = vunpack.c.l.b16 %v845
        %v1312 = vunpack.c.h.b16 %v845
        %v1313 = vunpack.c.l.b16 %v846
        %v1314 = vunpack.c.h.b16 %v846
        %v1315 = vunpack.c.l.b16 %v847
        %v1316 = vunpack.c.h.b16 %v847
        %v1317 = vunpack.c.l.b16 %v848
        %v1318 = vunpack.c.h.b16 %v848
        %v1319 = vunpack.c.l.b16 %v849
        %v1320 = vunpack.c.h.b16 %v849
        %v1321 = vunpack.c.l.b16 %v850
        %v1322 = vunpack.c.h.b16 %v850
        %v1323 = vunpack.c.l.b16 %v851
        %v1324 = vunpack.c.h.b16 %v851
        %v1325 = vunpack.c.l.b16 %v852
        %v1326 = vunpack.c.h.b16 %v852
        %v1327 = vunpack.c.l.b16 %v853
        %v1328 = vunpack.c.h.b16 %v853
        %v1329 = vunpack.c.l.b16 %v854
        %v1330 = vunpack.c.h.b16 %v854
        %v1331 = vunpack.c.l.b16 %v855
        %v1332 = vunpack.c.h.b16 %v855
        %v1333 = vunpack.c.l.b16 %v856
        %v1334 = vunpack.c.h.b16 %v856
        %v1335 = vunpack.c.l.b16 %v857
        %v1336 = vunpack.c.h.b16 %v857
        %v1337 = vunpack.c.l.b16 %v858
        %v1338 = vunpack.c.h.b16 %v858
        %v1339 = vunpack.c.l.b16 %v859
        %v1340 = vunpack.c.h.b16 %v859
        %v1341 = vunpack.c.l.b16 %v860
        %v1342 = vunpack.c.h.b16 %v860
        %v1343 = vunpack.c.l.b16 %v861
        %v1344 = vunpack.c.h.b16 %v861
        %v1345 = vunpack.c.l.b16 %v862
        %v1346 = vunpack.c.h.b16 %v862
        %v1347 = vunpack.c.l.b16 %v863
        %v1348 = vunpack.c.h.b16 %v863
        %v1349 = vunpack.c.l.b16 %v864
        %v1350 = vunpack.c.h.b16 %v864
        %v1351 = vunpack.c.l.b16 %v865
        %v1352 = vunpack.c.h.b16 %v865
        %v1353 = vunpack.c.l.b16 %v866
        %v1354 = vunpack.c.h.b16 %v866
        %v1355 = vunpack.c.l.b16 %v867
        %v1356 = vunpack.c.h.b16 %v867
        %v1357 = vunpack.c.l.b16 %v868
        %v1358 = vunpack.c.h.b16 %v868
        %v1359 = vunpack.c.l.b16 %v869
        %v1360 = vunpack.c.h.b16 %v869
        %v1361 = vunpack.c.l.b16 %v870
        %v1362 = vunpack.c.h.b16 %v870
        %v1363 = vunpack.c.l.b16 %v871
        %v1364 = vunpack.c.h.b16 %v871
        %v1365 = vunpack.c.l.b16 %v872
        %v1366 = vunpack.c.h.b16 %v872
        %v1367 = vunpack.c.l.b16 %v873
        %v1368 = vunpack.c.h.b16 %v873
        %v1369 = vunpack.c.l.b16 %v874
        %v1370 = vunpack.c.h.b16 %v874
        %v1371 = vunpack.c.l.b16 %v875
        %v1372 = vunpack.c.h.b16 %v875
        %v1373 = vunpack.c.l.b16 %v876
        %v1374 = vunpack.c.h.b16 %v876
        %v1375 = vunpack.c.l.b16 %v877
        %v1376 = vunpack.c.h.b16 %v877
        %v1377 = vunpack.c.l.b16 %v878
        %v1378 = vunpack.c.h.b16 %v878
        %v1379 = vunpack.c.l.b16 %v879
        %v1380 = vunpack.c.h.b16 %v879
        %v1381 = vunpack.c.l.b16 %v880
        %v1382 = vunpack.c.h.b16 %v880
        %v1383 = vunpack.c.l.b16 %v881
        %v1384 = vunpack.c.h.b16 %v881
        %v1385 = vunpack.c.l.b16 %v882
        %v1386 = vunpack.c.h.b16 %v882
        %v1387 = vunpack.c.l.b16 %v883
        %v1388 = vunpack.c.h.b16 %v883
        %v1389 = vunpack.c.l.b16 %v884
        %v1390 = vunpack.c.h.b16 %v884
        %v1391 = vunpack.c.l.b16 %v885
        %v1392 = vunpack.c.h.b16 %v885
        %v1393 = vunpack.c.l.b16 %v886
        %v1394 = vunpack.c.h.b16 %v886
        %v1395 = vunpack.c.l.b16 %v887
        %v1396 = vunpack.c.h.b16 %v887
        %v1397 = vunpack.c.l.b16 %v888
        %v1398 = vunpack.c.h.b16 %v888
        %v1399 = vunpack.c.l.b16 %v889
        %v1400 = vunpack.c.h.b16 %v889
        %v1401 = vunpack.c.l.b16 %v890
        %v1402 = vunpack.c.h.b16 %v890
        %v1403 = vunpack.c.l.b16 %v891
        %v1404 = vunpack.c.h.b16 %v891
        %v1405 = vunpack.c.l.b16 %v892
        %v1406 = vunpack.c.h.b16 %v892
        %v1407 = vunpack.c.l.b16 %v893
        %v1408 = vunpack.c.h.b16 %v893
        %v1409 = vunpack.c.l.b16 %v894
        %v1410 = vunpack.c.h.b16 %v894
        %v1411 = vunpack.c.l.b16 %v895
        %v1412 = vunpack.c.h.b16 %v895
        %v1413 = vunpack.c.l.b16 %v896
        %v1414 = vunpack.c.h.b16 %v896
        %v1415 = vunpack.c.l.b16 %v897
        %v1416 = vunpack.c.h.b16 %v897
        %v1417 = vunpack.c.l.b16 %v898
        %v1418 = vunpack.c.h.b16 %v898
        %v1419 = vunpack.c.l.b16 %v899
        %v1420 = vunpack.c.h.b16 %v899
        %v1421 = vunpack.c.l.b16 %v900
        %v1422 = vunpack.c.h.b16 %v900
        %v1423 = vunpack.c.l.b16 %v901
        %v1424 = vunpack.c.h.b16 %v901
        %v1425 = vunpack.c.l.b16 %v902
        %v1426 = vunpack.c.h.b16 %v902
        %v1427 = vunpack.c.l.b16 %v903
        %v1428 = vunpack.c.h.b16 %v903
        %v1429 = vunpack.c.l.b16 %v904
        %v1430 = vunpack.c.h.b16 %v904
        %v1431 = vunpack.c.l.b16 %v905
        %v1432 = vunpack.c.h.b16 %v905
        %v1433 = vunpack.c.l.b16 %v906
        %v1434 = vunpack.c.h.b16 %v906
        %v1435 = vunpack.c.l.b16 %v907
        %v1436 = vunpack.c.h.b16 %v907
        %v1437 = vunpack.c.l.b16 %v908
        %v1438 = vunpack.c.h.b16 %v908
        %v1439 = vunpack.c.l.b16 %v909
        %v1440 = vunpack.c.h.b16 %v909
        %v1441 = vunpack.c.l.b16 %v910
        %v1442 = vunpack.c.h.b16 %v910
        %v1443 = vunpack.c.l.b16 %v911
        %v1444 = vunpack.c.h.b16 %v911
        %v1445 = vunpack.c.l.b16 %v912
        %v1446 = vunpack.c.h.b16 %v912
        %v1447 = vpack.c.b16 %v1137, %v1127
        %v1448 = vpack.c.b16 %v1138, %v1128
        %v1449 = vpack.c.b16 %v1139, %v1129
        %v1450 = vpack.c.b16 %v1140, %v1130
        %v1451 = vpack.c.b16 %v1141, %v1131
        %v1452 = vpack.c.b16 %v1142, %v1132
        %v1453 = vpack.c.b16 %v1143, %v1133
        %v1454 = vpack.c.b16 %v1144, %v1134
        %v1455 = vpack.c.b16 %v1145, %v1135
        %v1456 = vpack.c.b16 %v1146, %v1136
        %v1457 = vpack.c.b16 %v1157, %v1147
        %v1458 = vpack.c.b16 %v1158, %v1148
        %v1459 = vpack.c.b16 %v1159, %v1149
        %v1460 = vpack.c.b16 %v1160, %v1150
        %v1461 = vpack.c.b16 %v1161, %v1151
        %v1462 = vpack.c.b16 %v1162, %v1152
        %v1463 = vpack.c.b16 %v1163, %v1153
        %v1464 = vpack.c.b16 %v1164, %v1154
        %v1465 = vpack.c.b16 %v1165, %v1155
        %v1466 = vpack.c.b16 %v1166, %v1156
        %v1467 = vpack.c.b16 %v1177, %v1167
        %v1468 = vpack.c.b16 %v1178, %v1168
        %v1469 = vpack.c.b16 %v1179, %v1169
        %v1470 = vpack.c.b16 %v1180, %v1170
        %v1471 = vpack.c.b16 %v1181, %v1171
        %v1472 = vpack.c.b16 %v1182, %v1172
        %v1473 = vpack.c.b16 %v1183, %v1173
        %v1474 = vpack.c.b16 %v1184, %v1174
        %v1475 = vpack.c.b16 %v1185, %v1175
        %v1476 = vpack.c.b16 %v1186, %v1176
        %v1477 = vpack.c.b16 %v1197, %v1187
        %v1478 = vpack.c.b16 %v1198, %v1188
        %v1479 = vpack.c.b16 %v1199, %v1189
        %v1480 = vpack.c.b16 %v1200, %v1190
        %v1481 = vpack.c.b16 %v1201, %v1191
        %v1482 = vpack.c.b16 %v1202, %v1192
        %v1483 = vpack.c.b16 %v1203, %v1193
        %v1484 = vpack.c.b16 %v1204, %v1194
        %v1485 = vpack.c.b16 %v1205, %v1195
        %v1486 = vpack.c.b16 %v1206, %v1196
        %v1487 = vpack.c.b16 %v1217, %v1207
        %v1488 = vpack.c.b16 %v1218, %v1208
        %v1489 = vpack.c.b16 %v1219, %v1209
        %v1490 = vpack.c.b16 %v1220, %v1210
        %v1491 = vpack.c.b16 %v1221, %v1211
        %v1492 = vpack.c.b16 %v1222, %v1212
        %v1493 = vpack.c.b16 %v1223, %v1213
        %v1494 = vpack.c.b16 %v1224, %v1214
        %v1495 = vpack.c.b16 %v1225, %v1215
        %v1496 = vpack.c.b16 %v1226, %v1216
        %v1497 = vpack.c.b16 %v1237, %v1227
        %v1498 = vpack.c.b16 %v1238, %v1228
        %v1499 = vpack.c.b16 %v1239, %v1229
        %v1500 = vpack.c.b16 %v1240, %v1230
        %v1501 = vpack.c.b16 %v1241, %v1231
        %v1502 = vpack.c.b16 %v1242, %v1232
        %v1503 = vpack.c.b16 %v1243, %v1233
        %v1504 = vpack.c.b16 %v1244, %v1234
        %v1505 = vpack.c.b16 %v1245, %v1235
        %v1506 = vpack.c.b16 %v1246, %v1236
        %v1507 = vpack.c.b16 %v1257, %v1247
        %v1508 = vpack.c.b16 %v1258, %v1248
        %v1509 = vpack.c.b16 %v1259, %v1249
        %v1510 = vpack.c.b16 %v1260, %v1250
        %v1511 = vpack.c.b16 %v1261, %v1251
        %v1512 = vpack.c.b16 %v1262, %v1252
        %v1513 = vpack.c.b16 %v1263, %v1253
        %v1514 = vpack.c.b16 %v1264, %v1254
        %v1515 = vpack.c.b16 %v1265, %v1255
        %v1516 = vpack.c.b16 %v1266, %v1256
        %v1517 = vpack.c.b16 %v1277, %v1267
        %v1518 = vpack.c.b16 %v1278, %v1268
        %v1519 = vpack.c.b16 %v1279, %v1269
        %v1520 = vpack.c.b16 %v1280, %v1270
        %v1521 = vpack.c.b16 %v1281, %v1271
        %v1522 = vpack.c.b16 %v1282, %v1272
        %v1523 = vpack.c.b16 %v1283, %v1273
        %v1524 = vpack.c.b16 %v1284, %v1274
        %v1525 = vpack.c.b16 %v1285, %v1275
        %v1526 = vpack.c.b16 %v1286, %v1276
        %v1527 = vpack.c.b16 %v1297, %v1287
        %v1528 = vpack.c.b16 %v1298, %v1288
        %v1529 = vpack.c.b16 %v1299, %v1289
        %v1530 = vpack.c.b16 %v1300, %v1290
        %v1531 = vpack.c.b16 %v1301, %v1291
        %v1532 = vpack.c.b16 %v1302, %v1292
        %v1533 = vpack.c.b16 %v1303, %v1293
        %v1534 = vpack.c.b16 %v1304, %v1294
        %v1535 = vpack.c.b16 %v1305, %v1295
        %v1536 = vpack.c.b16 %v1306, %v1296
        %v1537 = vpack.c.b16 %v1317, %v1307
        %v1538 = vpack.c.b16 %v1318, %v1308
        %v1539 = vpack.c.b16 %v1319, %v1309
        %v1540 = vpack.c.b16 %v1320, %v1310
        %v1541 = vpack.c.b16 %v1321, %v1311
        %v1542 = vpack.c.b16 %v1322, %v1312
        %v1543 = vpack.c.b16 %v1323, %v1313
        %v1544 = vpack.c.b16 %v1324, %v1314
        %v1545 = vpack.c.b16 %v1325, %v1315
        %v1546 = vpack.c.b16 %v1326, %v1316
        %v1547 = vpack.c.b16 %v1337, %v1327
        %v1548 = vpack.c.b16 %v1338, %v1328
        %v1549 = vpack.c.b16 %v1339, %v1329
        %v1550 = vpack.c.b16 %v1340, %v1330
        %v1551 = vpack.c.b16 %v1341, %v1331
        %v1552 = vpack.c.b16 %v1342, %v1332
        %v1553 = vpack.c.b16 %v1343, %v1333
        %v1554 = vpack.c.b16 %v1344, %v1334
        %v1555 = vpack.c.b16 %v1345, %v1335
        %v1556 = vpack.c.b16 %v1346, %v1336
        %v1557 = vpack.c.b16 %v1357, %v1347
        %v1558 = vpack.c.b16 %v1358, %v1348
        %v1559 = vpack.c.b16 %v1359, %v1349
        %v1560 = vpack.c.b16 %v1360, %v1350
        %v1561 = vpack.c.b16 %v1361, %v1351
        %v1562 = vpack.c.b16 %v1362, %v1352
        %v1563 = vpack.c.b16 %v1363, %v1353
        %v1564 = vpack.c.b16 %v1364, %v1354
        %v1565 = vpack.c.b16 %v1365, %v1355
        %v1566 = vpack.c.b16 %v1366, %v1356
        %v1567 = vpack.c.b16 %v1377, %v1367
        %v1568 = vpack.c.b16 %v1378, %v1368
        %v1569 = vpack.c.b16 %v1379, %v1369
        %v1570 = vpack.c.b16 %v1380, %v1370
        %v1571 = vpack.c.b16 %v1381, %v1371
        %v1572 = vpack.c.b16 %v1382, %v1372
        %v1573 = vpack.c.b16 %v1383, %v1373
        %v1574 = vpack.c.b16 %v1384, %v1374
        %v1575 = vpack.c.b16 %v1385, %v1375
        %v1576 = vpack.c.b16 %v1386, %v1376
        %v1577 = vpack.c.b16 %v1397, %v1387
        %v1578 = vpack.c.b16 %v1398, %v1388
        %v1579 = vpack.c.b16 %v1399, %v1389
        %v1580 = vpack.c.b16 %v1400, %v1390
        %v1581 = vpack.c.b16 %v1401, %v1391
        %v1582 = vpack.c.b16 %v1402, %v1392
        %v1583 = vpack.c.b16 %v1403, %v1393
        %v1584 = vpack.c.b16 %v1404, %v1394
        %v1585 = vpack.c.b16 %v1405, %v1395
        %v1586 = vpack.c.b16 %v1406, %v1396
        %v1587 = vpack.c.b16 %v1417, %v1407
        %v1588 = vpack.c.b16 %v1418, %v1408
        %v1589 = vpack.c.b16 %v1419, %v1409
        %v1590 = vpack.c.b16 %v1420, %v1410
        %v1591 = vpack.c.b16 %v1421, %v1411
        %v1592 = vpack.c.b16 %v1422, %v1412
        %v1593 = vpack.c.b16 %v1423, %v1413
        %v1594 = vpack.c.b16 %v1424, %v1414
        %v1595 = vpack.c.b16 %v1425, %v1415
        %v1596 = vpack.c.b16 %v1426, %v1416
        %v1597 = vpack.c.b16 %v1437, %v1427
        %v1598 = vpack.c.b16 %v1438, %v1428
        %v1599 = vpack.c.b16 %v1439, %v1429
        %v1600 = vpack.c.b16 %v1440, %v1430
        %v1601 = vpack.c.b16 %v1441, %v1431
        %v1602 = vpack.c.b16 %v1442, %v1432
        %v1603 = vpack.c.b16 %v1443, %v1433
        %v1604 = vpack.c.b16 %v1444, %v1434
        %v1605 = vpack.c.b16 %v1445, %v1435
        %v1606 = vpack.c.b16 %v1446, %v1436
        %1767 = vmatprep.subr.bf16.mxu0 %v1448
        %1768 = vmatpush1.bf16.msra.mxu0 %v1447
        %1769 = vmatprep.subr.bf16.mxu0 %v1458
        %1770 = vmatpush1.bf16.msra.mxu0 %v1457
        %1771 = vmatprep.subr.bf16.mxu0 %v1468
        %1772 = vmatpush1.bf16.msra.mxu0 %v1467
        %1773 = vmatprep.subr.bf16.mxu0 %v1478
        %1774 = vmatpush1.bf16.msra.mxu0 %v1477
        %1775 = vmatprep.subr.bf16.mxu0 %v1488
        %1776 = vmatpush1.bf16.msra.mxu0 %v1487
        %1777 = vmatprep.subr.bf16.mxu0 %v1498
        %1778 = vmatpush1.bf16.msra.mxu0 %v1497
        %1779 = vmatprep.subr.bf16.mxu0 %v1508
        %1780 = vmatpush1.bf16.msra.mxu0 %v1507
        %1781 = vmatprep.subr.bf16.mxu0 %v1518
        %1782 = vmatpush1.bf16.msra.mxu0 %v1517
        %1783 = vmatprep.subr.bf16.mxu0 %v1528
        %1784 = vmatpush1.bf16.msra.mxu0 %v1527
        %1785 = vmatprep.subr.bf16.mxu0 %v1538
        %1786 = vmatpush1.bf16.msra.mxu0 %v1537
        %1787 = vmatprep.subr.bf16.mxu0 %v1548
        %1788 = vmatpush1.bf16.msra.mxu0 %v1547
        %1789 = vmatprep.subr.bf16.mxu0 %v1558
        %1790 = vmatpush1.bf16.msra.mxu0 %v1557
        %1791 = vmatprep.subr.bf16.mxu0 %v1568
        %1792 = vmatpush1.bf16.msra.mxu0 %v1567
        %1793 = vmatprep.subr.bf16.mxu0 %v1578
        %1794 = vmatpush1.bf16.msra.mxu0 %v1577
        %1795 = vmatprep.subr.bf16.mxu0 %v1588
        %1796 = vmatpush1.bf16.msra.mxu0 %v1587
        %1797 = vmatprep.subr.bf16.mxu0 %v1598
        %1798 = vmatpush1.bf16.msra.mxu0 %v1597
        %1799 = vmatprep.mubr.bf16.mxu0 %v752
        %1800 = vmatmul.mubr.bf16.gmra.mrb[0].mxu0 %v751
        %v1801 = vpop.f32.mrb[0].mxu0
        %v1802 = vadd.f32 %v920, %v1801
        %v1803 = vpop.f32.mrb[0].mxu0
        %v1804 = vadd.f32 %v924, %v1803
        %v1805 = vpop.f32.mrb[0].mxu0
        %v1806 = vpop.f32.mrb[0].mxu0
        %1807 = vdwg.mxu0
        %1808 = vmatprep.subr.bf16.mxu0 %v1450
        %1809 = vmatpush1.bf16.msra.mxu0 %v1449
        %1810 = vmatprep.subr.bf16.mxu0 %v1460
        %1811 = vmatpush1.bf16.msra.mxu0 %v1459
        %1812 = vmatprep.subr.bf16.mxu0 %v1470
        %1813 = vmatpush1.bf16.msra.mxu0 %v1469
        %1814 = vmatprep.subr.bf16.mxu0 %v1480
        %1815 = vmatpush1.bf16.msra.mxu0 %v1479
        %1816 = vmatprep.subr.bf16.mxu0 %v1490
        %1817 = vmatpush1.bf16.msra.mxu0 %v1489
        %1818 = vmatprep.subr.bf16.mxu0 %v1500
        %1819 = vmatpush1.bf16.msra.mxu0 %v1499
        %1820 = vmatprep.subr.bf16.mxu0 %v1510
        %1821 = vmatpush1.bf16.msra.mxu0 %v1509
        %1822 = vmatprep.subr.bf16.mxu0 %v1520
        %1823 = vmatpush1.bf16.msra.mxu0 %v1519
        %1824 = vmatprep.subr.bf16.mxu0 %v1530
        %1825 = vmatpush1.bf16.msra.mxu0 %v1529
        %1826 = vmatprep.subr.bf16.mxu0 %v1540
        %1827 = vmatpush1.bf16.msra.mxu0 %v1539
        %1828 = vmatprep.subr.bf16.mxu0 %v1550
        %1829 = vmatpush1.bf16.msra.mxu0 %v1549
        %1830 = vmatprep.subr.bf16.mxu0 %v1560
        %1831 = vmatpush1.bf16.msra.mxu0 %v1559
        %1832 = vmatprep.subr.bf16.mxu0 %v1570
        %1833 = vmatpush1.bf16.msra.mxu0 %v1569
        %1834 = vmatprep.subr.bf16.mxu0 %v1580
        %1835 = vmatpush1.bf16.msra.mxu0 %v1579
        %1836 = vmatprep.subr.bf16.mxu0 %v1590
        %1837 = vmatpush1.bf16.msra.mxu0 %v1589
        %1838 = vmatprep.subr.bf16.mxu0 %v1600
        %1839 = vmatpush1.bf16.msra.mxu0 %v1599
        %1840 = vmatprep.mubr.bf16.mxu0 %v752
        %1841 = vmatmul.mubr.bf16.gmra.mrb[0].mxu0 %v751
        %v1842 = vpop.f32.mrb[0].mxu0
        %v1843 = vadd.f32 %v928, %v1842
        %v1844 = vpop.f32.mrb[0].mxu0
        %v1845 = vadd.f32 %v932, %v1844
        %v1846 = vpop.f32.mrb[0].mxu0
        %v1847 = vpop.f32.mrb[0].mxu0
        %1848 = vdwg.mxu0
        %1849 = vmatprep.subr.bf16.mxu0 %v1452
        %1850 = vmatpush1.bf16.msra.mxu0 %v1451
        %1851 = vmatprep.subr.bf16.mxu0 %v1462
        %1852 = vmatpush1.bf16.msra.mxu0 %v1461
        %1853 = vmatprep.subr.bf16.mxu0 %v1472
        %1854 = vmatpush1.bf16.msra.mxu0 %v1471
        %1855 = vmatprep.subr.bf16.mxu0 %v1482
        %1856 = vmatpush1.bf16.msra.mxu0 %v1481
        %1857 = vmatprep.subr.bf16.mxu0 %v1492
        %1858 = vmatpush1.bf16.msra.mxu0 %v1491
        %1859 = vmatprep.subr.bf16.mxu0 %v1502
        %1860 = vmatpush1.bf16.msra.mxu0 %v1501
        %1861 = vmatprep.subr.bf16.mxu0 %v1512
        %1862 = vmatpush1.bf16.msra.mxu0 %v1511
        %1863 = vmatprep.subr.bf16.mxu0 %v1522
        %1864 = vmatpush1.bf16.msra.mxu0 %v1521
        %1865 = vmatprep.subr.bf16.mxu0 %v1532
        %1866 = vmatpush1.bf16.msra.mxu0 %v1531
        %1867 = vmatprep.subr.bf16.mxu0 %v1542
        %1868 = vmatpush1.bf16.msra.mxu0 %v1541
        %1869 = vmatprep.subr.bf16.mxu0 %v1552
        %1870 = vmatpush1.bf16.msra.mxu0 %v1551
        %1871 = vmatprep.subr.bf16.mxu0 %v1562
        %1872 = vmatpush1.bf16.msra.mxu0 %v1561
        %1873 = vmatprep.subr.bf16.mxu0 %v1572
        %1874 = vmatpush1.bf16.msra.mxu0 %v1571
        %1875 = vmatprep.subr.bf16.mxu0 %v1582
        %1876 = vmatpush1.bf16.msra.mxu0 %v1581
        %1877 = vmatprep.subr.bf16.mxu0 %v1592
        %1878 = vmatpush1.bf16.msra.mxu0 %v1591
        %1879 = vmatprep.subr.bf16.mxu0 %v1602
        %1880 = vmatpush1.bf16.msra.mxu0 %v1601
        %1881 = vmatprep.mubr.bf16.mxu0 %v752
        %1882 = vmatmul.mubr.bf16.gmra.mrb[0].mxu0 %v751
        %v1883 = vpop.f32.mrb[0].mxu0
        %v1884 = vadd.f32 %v936, %v1883
        %v1885 = vpop.f32.mrb[0].mxu0
        %v1886 = vadd.f32 %v940, %v1885
        %v1887 = vpop.f32.mrb[0].mxu0
        %v1888 = vpop.f32.mrb[0].mxu0
        %1889 = vdwg.mxu0
        %1890 = vmatprep.subr.bf16.mxu0 %v1454
        %1891 = vmatpush1.bf16.msra.mxu0 %v1453
        %1892 = vmatprep.subr.bf16.mxu0 %v1464
        %1893 = vmatpush1.bf16.msra.mxu0 %v1463
        %1894 = vmatprep.subr.bf16.mxu0 %v1474
        %1895 = vmatpush1.bf16.msra.mxu0 %v1473
        %1896 = vmatprep.subr.bf16.mxu0 %v1484
        %1897 = vmatpush1.bf16.msra.mxu0 %v1483
        %1898 = vmatprep.subr.bf16.mxu0 %v1494
        %1899 = vmatpush1.bf16.msra.mxu0 %v1493
        %1900 = vmatprep.subr.bf16.mxu0 %v1504
        %1901 = vmatpush1.bf16.msra.mxu0 %v1503
        %1902 = vmatprep.subr.bf16.mxu0 %v1514
        %1903 = vmatpush1.bf16.msra.mxu0 %v1513
        %1904 = vmatprep.subr.bf16.mxu0 %v1524
        %1905 = vmatpush1.bf16.msra.mxu0 %v1523
        %1906 = vmatprep.subr.bf16.mxu0 %v1534
        %1907 = vmatpush1.bf16.msra.mxu0 %v1533
        %1908 = vmatprep.subr.bf16.mxu0 %v1544
        %1909 = vmatpush1.bf16.msra.mxu0 %v1543
        %1910 = vmatprep.subr.bf16.mxu0 %v1554
        %1911 = vmatpush1.bf16.msra.mxu0 %v1553
        %1912 = vmatprep.subr.bf16.mxu0 %v1564
        %1913 = vmatpush1.bf16.msra.mxu0 %v1563
        %1914 = vmatprep.subr.bf16.mxu0 %v1574
        %1915 = vmatpush1.bf16.msra.mxu0 %v1573
        %1916 = vmatprep.subr.bf16.mxu0 %v1584
        %1917 = vmatpush1.bf16.msra.mxu0 %v1583
        %1918 = vmatprep.subr.bf16.mxu0 %v1594
        %1919 = vmatpush1.bf16.msra.mxu0 %v1593
        %1920 = vmatprep.subr.bf16.mxu0 %v1604
        %1921 = vmatpush1.bf16.msra.mxu0 %v1603
        %1922 = vmatprep.mubr.bf16.mxu0 %v752
        %1923 = vmatmul.mubr.bf16.gmra.mrb[0].mxu0 %v751
        %v1924 = vpop.f32.mrb[0].mxu0
        %v1925 = vadd.f32 %v944, %v1924
        %v1926 = vpop.f32.mrb[0].mxu0
        %v1927 = vadd.f32 %v948, %v1926
        %v1928 = vpop.f32.mrb[0].mxu0
        %v1929 = vpop.f32.mrb[0].mxu0
        %1930 = vdwg.mxu0
        %1931 = vmatprep.subr.bf16.mxu0 %v1456
        %1932 = vmatpush1.bf16.msra.mxu0 %v1455
        %1933 = vmatprep.subr.bf16.mxu0 %v1466
        %1934 = vmatpush1.bf16.msra.mxu0 %v1465
        %1935 = vmatprep.subr.bf16.mxu0 %v1476
        %1936 = vmatpush1.bf16.msra.mxu0 %v1475
        %1937 = vmatprep.subr.bf16.mxu0 %v1486
        %1938 = vmatpush1.bf16.msra.mxu0 %v1485
        %1939 = vmatprep.subr.bf16.mxu0 %v1496
        %1940 = vmatpush1.bf16.msra.mxu0 %v1495
        %1941 = vmatprep.subr.bf16.mxu0 %v1506
        %1942 = vmatpush1.bf16.msra.mxu0 %v1505
        %1943 = vmatprep.subr.bf16.mxu0 %v1516
        %1944 = vmatpush1.bf16.msra.mxu0 %v1515
        %1945 = vmatprep.subr.bf16.mxu0 %v1526
        %1946 = vmatpush1.bf16.msra.mxu0 %v1525
        %1947 = vmatprep.subr.bf16.mxu0 %v1536
        %1948 = vmatpush1.bf16.msra.mxu0 %v1535
        %1949 = vmatprep.subr.bf16.mxu0 %v1546
        %1950 = vmatpush1.bf16.msra.mxu0 %v1545
        %1951 = vmatprep.subr.bf16.mxu0 %v1556
        %1952 = vmatpush1.bf16.msra.mxu0 %v1555
        %1953 = vmatprep.subr.bf16.mxu0 %v1566
        %1954 = vmatpush1.bf16.msra.mxu0 %v1565
        %1955 = vmatprep.subr.bf16.mxu0 %v1576
        %1956 = vmatpush1.bf16.msra.mxu0 %v1575
        %1957 = vmatprep.subr.bf16.mxu0 %v1586
        %1958 = vmatpush1.bf16.msra.mxu0 %v1585
        %1959 = vmatprep.subr.bf16.mxu0 %v1596
        %1960 = vmatpush1.bf16.msra.mxu0 %v1595
        %1961 = vmatprep.subr.bf16.mxu0 %v1606
        %1962 = vmatpush1.bf16.msra.mxu0 %v1605
        %1963 = vmatprep.mubr.bf16.mxu0 %v752
        %1964 = vmatmul.mubr.bf16.gmra.mrb[0].mxu0 %v751
        %v1965 = vpop.f32.mrb[0].mxu0
        %v1966 = vadd.f32 %v952, %v1965
        %v1967 = vpop.f32.mrb[0].mxu0
        %v1968 = vadd.f32 %v956, %v1967
        %v1969 = vpop.f32.mrb[0].mxu0
        %v1970 = vpop.f32.mrb[0].mxu0
        %1971 = vdwg.mxu0
        %v1972 = vtanh.pop %v1802
        %v1973 = vtanh.pop %v1804
        %v1974 = vtanh.pop %v1843
        %v1975 = vtanh.pop %v1845
        %v1976 = vtanh.pop %v1884
        %v1977 = vtanh.pop %v1886
        %v1978 = vtanh.pop %v1925
        %v1979 = vtanh.pop %v1927
        %v1980 = vtanh.pop %v1966
        %v1981 = vtanh.pop %v1968
        %1982 = vst [vmem:[%s477] sm:$0xff] %v1972
        %1983 = vst [vmem:[%s477 + $0x8] sm:$0xff] %v1973
        %1984 = vst [vmem:[%s477 + $0x10] sm:$0xff] %v1974
        %1985 = vst [vmem:[%s477 + $0x18] sm:$0xff] %v1975
        %1986 = vst [vmem:[%s477 + $0x20] sm:$0xff] %v1976
        %1987 = vst [vmem:[%s477 + $0x28] sm:$0xff] %v1977
        %1988 = vst [vmem:[%s477 + $0x30] sm:$0xff] %v1978
        %1989 = vst [vmem:[%s477 + $0x38] sm:$0xff] %v1979
        %1990 = vst [vmem:[%s477 + $0x40] sm:$0xff] %v1980
        %1991 = vst [vmem:[%s477 + $0x48] sm:$0xff] %v1981
        %s1992 = sand.u32 %s237, 1
        %s1993 = scalar_lea.sflag [#allocation4], %s1992
        %s1994 = sand.u32 %s237, 1
        %s1995 = smul.addr %s1994, 80
        %s1996 = scalar_lea.vmem [#allocation17], %s1995
        // Predicated region
        $region93: #{tpu_custom_call.1} parent=55 // pred_check
          %p1997 = pneg %p247
        $region94: #{tpu_custom_call.1} parent=55 // pred_check_branch
          %1999 = sbr.rel (%p1997) target = $region96
        $region95: #{tpu_custom_call.1} parent=55 // pred_region
          %s2000 = smul.u32 10, %s30
          %s2002 = ssub.s32 1280, 1280
          %2003 = vsyncadd %s1993, %s2002
          %s2004 = smul.addr %s2000, 128
          %s2005 = scalar_lea.hbm %s9, %s2004
          %s2007 = sshll.u32 %s1996, 4
          %s2008 = int_to_ptr.vmem [resolvable:$true] %s2007
          %2010 = dma.vmem_to_hbm [thread:$0]  %s2008, 1280, %s2005, %s1993
        $region96: #{tpu_custom_call.1} parent=55 // pred_fallthru
          _
      $region56: #{tpu_custom_call.1} parent=5 // pred_fallthru
        _
      %p2011 = scmp.le.s32.totalorder 2, %s25
      // Predicated region
      $region97: #{tpu_custom_call.1} parent=5 // pred_check
        %p2012 = pneg %p2011
      $region98: #{tpu_custom_call.1} parent=5 // pred_check_branch
        %2014 = sbr.rel (%p2012) target = $region100
      $region99: #{tpu_custom_call.1} parent=5 // pred_region
        %s2015 = ssub.s32 %s25, 2
        // Predicated region
        $region101: #{tpu_custom_call.1} parent=99 // pred_check
          %p2016 = pneg %p253
        $region102: #{tpu_custom_call.1} parent=99 // pred_check_branch
          %2018 = sbr.rel (%p2016) target = $region104
        $region103: #{tpu_custom_call.1} parent=99 // pred_region
          %s2019 = sand.u32 %s238, 1
          %s2020 = scalar_lea.sflag [#allocation4], %s2019
          %s2021 = sand.u32 %s238, 1
          %s2022 = smul.addr %s2021, 80
          %s2023 = scalar_lea.vmem [#allocation17], %s2022
          %2024 = dma.done %s2020, 1280
        $region104: #{tpu_custom_call.1} parent=99 // pred_fallthru
          _
      $region100: #{tpu_custom_call.1} parent=5 // pred_fallthru
        _
    $region6: #{tpu_custom_call.1} parent=1 // loop_footer
      %s29 = sadd.s32 1, %s25
    $region7: #{tpu_custom_call.1} parent=1 // loop_footer_branch
      %24 = sbr.rel target = $region3
    $region8: #{tpu_custom_call.1} parent=1 // loop_exit
      _
    %2025 = vsyncpa [#allocation3], 1
    %s2026 = scalar_lea.sflag [#allocation3], 1
    %2027 = vsyncpa %s2026, 1
    %2028 = vsyncpa [#allocation6], 1
    %2029 = vsyncpa [#allocation9], 1
    %2030 = vsyncpa [#allocation12], 1
    %2031 = vsyncpa [#allocation15], 1
    %s2032 = scalar_lea.sflag [#allocation15], 1
    %2033 = vsyncpa %s2032, 1
    %2034 = vsyncpa [#allocation4], 1
    %s2035 = scalar_lea.sflag [#allocation4], 1
    %2036 = vsyncpa %s2035, 1

</llo_original>
